<compile_context>
chip_gen: v5e
topology: v5e:2x2
jax: 0.10.0
libtpu: 0.0.40
codegen_flags: <defaults>
</compile_context>

<pallas_src>
import math

import jax
import jax.numpy as jnp
from jax.experimental import pallas as pl
from jax.experimental.pallas import tpu as pltpu

# ----------------------------- config (small synthetic GPT-2) -----------------------------
VOCAB = 64
VOCAB_PAD = 128      # lane-dense logits (padding sliced off in the wrapper)
N_EMBD = 32          # gpt_embedding_size
N_HEAD = 4
HEAD_DIM = N_EMBD // N_HEAD
N_LAYER = 2
N_POS = 64
PREFIX_LEN = 5       # <= 10  -> clip_project is MLP((prefix_size, E*P//2, E*P)) with Tanh
PREFIX_SIZE = 32
TEXT_LEN = 8
SEQ_LEN = PREFIX_LEN + TEXT_LEN     # 13 real rows
S_PAD = 16                          # padded to 2 full sublane tiles
BATCH = 2
LN_EPS = 1e-5
CLIP_MID = N_EMBD * PREFIX_LEN // 2
CLIP_OUT = N_EMBD * PREFIX_LEN
NEG_INF = -1e9
VEC_W = 128          # lane width of the packed per-layer vector slab


# ----------------------------- in-kernel helpers (traced inside Pallas) -------------------
def _layernorm(x, g, b):
    mu = jnp.mean(x, axis=-1, keepdims=True)
    var = jnp.mean((x - mu) ** 2, axis=-1, keepdims=True)
    return (x - mu) * jax.lax.rsqrt(var + LN_EPS) * g + b


def _gelu_new(x):
    # GPT-2 "gelu_new": tanh approximation (f32 on the VPU/EUP)
    return 0.5 * x * (1.0 + jnp.tanh(jnp.sqrt(2.0 / jnp.pi) * (x + 0.044715 * x * x * x)))


# ----------------------------- fused GPT-2 forward kernel ---------------------------------
def gpt2_prefix_kernel(x_ref, bias_ref, wqkv_ref, wattn_ref, wfc_ref, wprj_ref,
                       vecs_ref, lnf_ref, wtet_ref, logits_ref):
    x = x_ref[...]                       # (S_PAD, E) f32 hidden state (inputs_embeds, padded)
    bias = bias_ref[...]                 # (S_PAD, S_PAD) additive causal mask (0 / -1e9)

    # Static layer unroll: every layer's weights are VMEM-resident full blocks.
    for l in range(N_LAYER):
        vec = vecs_ref[l]                # (8, 128) packed per-layer LN params / biases (f32)
        ln1_g, ln1_b = vec[0:1, :N_EMBD], vec[1:2, :N_EMBD]
        b_qkv = vec[2:3, :3 * N_EMBD]    # q-part already scaled by 1/sqrt(head_dim)
        b_att = vec[3:4, :N_EMBD]
        ln2_g, ln2_b = vec[4:5, :N_EMBD], vec[5:6, :N_EMBD]
        b_fc = vec[6:7, :4 * N_EMBD]
        b_prj = vec[7:8, :N_EMBD]

        # ---- attention: one fused QKV matmul, per-head scores, fused output projection ----
        a = _layernorm(x, ln1_g, ln1_b).astype(jnp.bfloat16)
        qkv = (jnp.dot(a, wqkv_ref[l], preferred_element_type=jnp.float32)
               + b_qkv).astype(jnp.bfloat16)                                     # (S, 3E)

        ctx_parts = []
        for h in range(N_HEAD):          # scores are block-diagonal across heads: stay per-head (2-D)
            qh = qkv[:, h * HEAD_DIM:(h + 1) * HEAD_DIM]                         # (S, Dh) bf16
            kh = qkv[:, N_EMBD + h * HEAD_DIM: N_EMBD + (h + 1) * HEAD_DIM]
            vh = qkv[:, 2 * N_EMBD + h * HEAD_DIM: 2 * N_EMBD + (h + 1) * HEAD_DIM]
            s = jax.lax.dot_general(qh, kh, (((1,), (1,)), ((), ())),
                                    preferred_element_type=jnp.float32) + bias   # (S, S) f32
            s = s - jnp.max(s, axis=-1, keepdims=True)
            p = jnp.exp(s)
            p = p * pl.reciprocal(jnp.sum(p, axis=-1, keepdims=True), approx=True)
            ctx_parts.append(jnp.dot(p.astype(jnp.bfloat16), vh,
                                     preferred_element_type=jnp.float32))        # (S, Dh) f32
        ctx = jnp.concatenate(ctx_parts, axis=-1).astype(jnp.bfloat16)           # (S, E)
        x = x + jnp.dot(ctx, wattn_ref[l], preferred_element_type=jnp.float32) + b_att

        # ---- MLP ----
        m = _layernorm(x, ln2_g, ln2_b).astype(jnp.bfloat16)
        f = _gelu_new(jnp.dot(m, wfc_ref[l], preferred_element_type=jnp.float32) + b_fc)
        x = x + jnp.dot(f.astype(jnp.bfloat16), wprj_ref[l],
                        preferred_element_type=jnp.float32) + b_prj

    # ---- final LayerNorm + tied lm head (full lane+sublane dense (16,128) store) ----
    lnf = lnf_ref[...]
    xf = _layernorm(x, lnf[0:1, :], lnf[1:2, :]).astype(jnp.bfloat16)
    logits_ref[...] = jnp.dot(xf, wtet_ref[...], preferred_element_type=jnp.float32)


# ----------------------------- wrapper -----------------------------------------------------
def clip_caption_forward(packed, tokens, prefix):
    B = tokens.shape[0]

    # glue (per perf review): wte gather, clip_project MLP, concat, positional add, seq pad.
    emb_text = jnp.take(packed['wte'], tokens, axis=0)                            # (B, T, E)
    mid = jnp.tanh(prefix @ packed['clip_w1'] + packed['clip_b1'])                # (B, CLIP_MID)
    proj = (mid @ packed['clip_w2'] + packed['clip_b2']).reshape(B, PREFIX_LEN, N_EMBD)
    x = jnp.concatenate([proj, emb_text], axis=1) + packed['wpe_s'][None]         # (B, S, E)
    x = jnp.pad(x, ((0, 0), (0, S_PAD - SEQ_LEN), (0, 0)))                        # (B, 16, E)

    def per_batch(*tail):
        zeros = (0,) * len(tail)
        return pl.BlockSpec((None,) + tail, lambda b: (b,) + zeros)

    def shared(*shape):
        zeros = (0,) * len(shape)
        return pl.BlockSpec(shape, lambda b: zeros)

    in_specs = [
        per_batch(S_PAD, N_EMBD),                 # inputs_embeds (padded)
        shared(S_PAD, S_PAD),                     # additive causal bias
        shared(N_LAYER, N_EMBD, 3 * N_EMBD),      # w_qkv (stacked, q pre-scaled), bf16
        shared(N_LAYER, N_EMBD, N_EMBD),          # attn output proj, bf16
        shared(N_LAYER, N_EMBD, 4 * N_EMBD),      # mlp fc W, bf16
        shared(N_LAYER, 4 * N_EMBD, N_EMBD),      # mlp proj W, bf16
        shared(N_LAYER, 8, VEC_W),                # packed per-layer LN params / biases, f32
        shared(2, N_EMBD),                        # ln_f gamma / beta
        shared(N_EMBD, VOCAB_PAD),                # tied lm head, pre-transposed & vocab-padded, bf16
    ]
    out_specs = pl.BlockSpec((None, S_PAD, VOCAB_PAD), lambda b: (b, 0, 0))

    logits_pad = pl.pallas_call(
        gpt2_prefix_kernel,
        out_shape=jax.ShapeDtypeStruct((B, S_PAD, VOCAB_PAD), jnp.float32),
        grid_spec=pltpu.PrefetchScalarGridSpec(
            num_scalar_prefetch=0,
            grid=(B,),                            # batch only; layers folded into the body
            in_specs=in_specs,
            out_specs=out_specs,
        ),
        compiler_params=pltpu.CompilerParams(dimension_semantics=("parallel",)),
    )(x, packed['attn_bias'], packed['w_qkv'], packed['w_attn'],
      packed['w_fc'], packed['w_prj'], packed['vecs'], packed['lnf_gb'],
      packed['wte_t'])

    return logits_pad[:, :SEQ_LEN, :VOCAB]        # drop sequence + vocab padding


# ----------------------------- deterministic parameter init & packing ----------------------
def init_params(key):
    keys = iter(jax.random.split(key, 128))

    def nrm(shape, scale=0.02):
        return scale * jax.random.normal(next(keys), shape, jnp.float32)

    params = {
        'wte': nrm((VOCAB, N_EMBD)),
        'wpe': nrm((N_POS, N_EMBD)),
        'clip_w1': nrm((PREFIX_SIZE, CLIP_MID)), 'clip_b1': nrm((1, CLIP_MID)),
        'clip_w2': nrm((CLIP_MID, CLIP_OUT)), 'clip_b2': nrm((1, CLIP_OUT)),
        'lnf_g': jnp.ones((1, N_EMBD), jnp.float32),
        'lnf_b': jnp.zeros((1, N_EMBD), jnp.float32),
        'blocks': [],
    }
    for _ in range(N_LAYER):
        params['blocks'].append({
            'ln1_g': jnp.ones((1, N_EMBD), jnp.float32),
            'ln1_b': jnp.zeros((1, N_EMBD), jnp.float32),
            'w_qkv': nrm((N_EMBD, 3 * N_EMBD)), 'b_qkv': nrm((1, 3 * N_EMBD)),
            'w_attn': nrm((N_EMBD, N_EMBD)), 'b_attn': nrm((1, N_EMBD)),
            'ln2_g': jnp.ones((1, N_EMBD), jnp.float32),
            'ln2_b': jnp.zeros((1, N_EMBD), jnp.float32),
            'w_fc': nrm((N_EMBD, 4 * N_EMBD)), 'b_fc': nrm((1, 4 * N_EMBD)),
            'w_prj': nrm((4 * N_EMBD, N_EMBD)), 'b_prj': nrm((1, N_EMBD)),
        })
    return params


def pack_params(p):
    """Stack per-layer weights into (N_LAYER, ...) arrays, fold the attention scale into the Q
    projection, pack the tiny per-layer vectors into one (L, 8, 128) slab, precompute the additive
    causal bias, pad/transpose the tied lm head, and cast matmul weights to bf16."""
    E = N_EMBD
    bf = lambda a: a.astype(jnp.bfloat16)
    stack = lambda name: jnp.stack([blk[name] for blk in p['blocks']], axis=0)

    w_qkv = stack('w_qkv')                                  # (L, E, 3E)
    b_qkv = stack('b_qkv')                                  # (L, 1, 3E)
    scale = 1.0 / math.sqrt(HEAD_DIM)                       # fold score scale into Q proj
    w_qkv = w_qkv.at[:, :, :E].multiply(scale)
    b_qkv = b_qkv.at[:, :, :E].multiply(scale)

    def row(v):                                             # (L, 1, K) -> (L, 1, VEC_W)
        return jnp.pad(v, ((0, 0), (0, 0), (0, VEC_W - v.shape[-1])))

    vecs = jnp.concatenate([
        row(stack('ln1_g')), row(stack('ln1_b')),
        row(b_qkv), row(stack('b_attn')),
        row(stack('ln2_g')), row(stack('ln2_b')),
        row(stack('b_fc')), row(stack('b_prj')),
    ], axis=1)                                              # (L, 8, 128) f32

    # additive causal mask over the padded sequence: 0 where attended, -1e9 on future positions
    # and on the dead pad key columns (pad query rows are discarded in the wrapper).
    r = jnp.arange(S_PAD)[:, None]
    c = jnp.arange(S_PAD)[None, :]
    attn_bias = jnp.where((c <= r) & (c < SEQ_LEN), 0.0, NEG_INF).astype(jnp.float32)

    wte_pad = jnp.pad(p['wte'], ((0, VOCAB_PAD - VOCAB), (0, 0)))   # zero rows for padded vocab

    return {
        'wte': p['wte'],                                    # f32, for the embedding gather
        'wpe_s': p['wpe'][:SEQ_LEN],                        # (S, E)
        'clip_w1': p['clip_w1'], 'clip_b1': p['clip_b1'],   # clip_project (wrapper-side, f32)
        'clip_w2': p['clip_w2'], 'clip_b2': p['clip_b2'],
        'attn_bias': attn_bias,
        'w_qkv': bf(w_qkv),
        'w_attn': bf(stack('w_attn')),
        'w_fc': bf(stack('w_fc')),
        'w_prj': bf(stack('w_prj')),
        'vecs': vecs,
        'lnf_gb': jnp.concatenate([p['lnf_g'], p['lnf_b']], axis=0),   # (2, E)
        'wte_t': bf(wte_pad.T),                             # (E, VOCAB_PAD) tied lm head
    }


# ----------------------------- main ---------------------------------------------------------
if __name__ == "__main__":
    root = jax.random.PRNGKey(0)
    k_params, k_tok, k_prefix = jax.random.split(root, 3)

    params = init_params(k_params)
    packed = pack_params(params)
    tokens = jax.random.randint(k_tok, (BATCH, TEXT_LEN), 0, VOCAB, dtype=jnp.int32)
    prefix = jax.random.normal(k_prefix, (BATCH, PREFIX_SIZE), jnp.float32)

    logits = jax.jit(clip_caption_forward)(packed, tokens, prefix)
    jax.block_until_ready(logits)

    assert logits.shape == (BATCH, PREFIX_LEN + TEXT_LEN, VOCAB)
    assert bool(jnp.all(jnp.isfinite(logits)))
    print("KERNEL_OK")
</pallas_src>

<mosaic_0001>
module attributes {stable_mosaic.version = 11 : i64} {
  func.func @gpt2_prefix_kernel(%arg0: i32, %arg1: memref<1x16x32xf32, #tpu.memory_space<vmem>>, %arg2: memref<16x16xf32, #tpu.memory_space<vmem>>, %arg3: memref<2x32x96xbf16, #tpu.memory_space<vmem>>, %arg4: memref<2x32x32xbf16, #tpu.memory_space<vmem>>, %arg5: memref<2x32x128xbf16, #tpu.memory_space<vmem>>, %arg6: memref<2x128x32xbf16, #tpu.memory_space<vmem>>, %arg7: memref<2x8x128xf32, #tpu.memory_space<vmem>>, %arg8: memref<2x32xf32, #tpu.memory_space<vmem>>, %arg9: memref<32x128xbf16, #tpu.memory_space<vmem>>, %arg10: memref<1x16x128xf32, #tpu.memory_space<vmem>>) attributes {dimension_semantics = [#tpu.dimension_semantics<parallel>], iteration_bounds = array<i64: 2>, scalar_prefetch = 0 : i64, scratch_operands = 0 : i64, tpu.core_type = #tpu.core_type<tc>, window_params = [{transform_indices = @transform_0, window_bounds = array<i64: 1, 16, 32>}, {pipeline_mode = #tpu.pipeline_mode<synchronous>, transform_indices = @transform_1, window_bounds = array<i64: 16, 16>}, {pipeline_mode = #tpu.pipeline_mode<synchronous>, transform_indices = @transform_2, window_bounds = array<i64: 2, 32, 96>}, {pipeline_mode = #tpu.pipeline_mode<synchronous>, transform_indices = @transform_3, window_bounds = array<i64: 2, 32, 32>}, {pipeline_mode = #tpu.pipeline_mode<synchronous>, transform_indices = @transform_4, window_bounds = array<i64: 2, 32, 128>}, {pipeline_mode = #tpu.pipeline_mode<synchronous>, transform_indices = @transform_5, window_bounds = array<i64: 2, 128, 32>}, {pipeline_mode = #tpu.pipeline_mode<synchronous>, transform_indices = @transform_6, window_bounds = array<i64: 2, 8, 128>}, {pipeline_mode = #tpu.pipeline_mode<synchronous>, transform_indices = @transform_7, window_bounds = array<i64: 2, 32>}, {pipeline_mode = #tpu.pipeline_mode<synchronous>, transform_indices = @transform_8, window_bounds = array<i64: 32, 128>}, {transform_indices = @transform_9, window_bounds = array<i64: 1, 16, 128>}]} {
    %c0 = arith.constant 0 : index
    %c0_0 = arith.constant 0 : index
    %c0_1 = arith.constant 0 : index
    %0 = vector.load %arg1[%c0, %c0_0, %c0_1] : memref<1x16x32xf32, #tpu.memory_space<vmem>>, vector<1x16x32xf32>
    %1 = vector.shape_cast %0 : vector<1x16x32xf32> to vector<16x32xf32>
    %c0_2 = arith.constant 0 : index
    %c0_3 = arith.constant 0 : index
    %2 = vector.load %arg2[%c0_2, %c0_3] : memref<16x16xf32, #tpu.memory_space<vmem>>, vector<16x16xf32>
    %c0_4 = arith.constant 0 : index
    %c0_5 = arith.constant 0 : index
    %c0_6 = arith.constant 0 : index
    %3 = vector.load %arg7[%c0_4, %c0_5, %c0_6] : memref<2x8x128xf32, #tpu.memory_space<vmem>>, vector<1x8x128xf32>
    %4 = vector.shape_cast %3 : vector<1x8x128xf32> to vector<8x128xf32>
    %5 = vector.extract_strided_slice %4 {offsets = [0, 0], sizes = [1, 32], strides = [1, 1]} : vector<8x128xf32> to vector<1x32xf32>
    %6 = vector.extract_strided_slice %4 {offsets = [1, 0], sizes = [1, 32], strides = [1, 1]} : vector<8x128xf32> to vector<1x32xf32>
    %7 = vector.extract_strided_slice %4 {offsets = [2, 0], sizes = [1, 96], strides = [1, 1]} : vector<8x128xf32> to vector<1x96xf32>
    %8 = vector.extract_strided_slice %4 {offsets = [3, 0], sizes = [1, 32], strides = [1, 1]} : vector<8x128xf32> to vector<1x32xf32>
    %9 = vector.extract_strided_slice %4 {offsets = [4, 0], sizes = [1, 32], strides = [1, 1]} : vector<8x128xf32> to vector<1x32xf32>
    %10 = vector.extract_strided_slice %4 {offsets = [5, 0], sizes = [1, 32], strides = [1, 1]} : vector<8x128xf32> to vector<1x32xf32>
    %11 = vector.extract_strided_slice %4 {offsets = [6, 0], sizes = [1, 128], strides = [1, 1]} : vector<8x128xf32> to vector<1x128xf32>
    %12 = vector.extract_strided_slice %4 {offsets = [7, 0], sizes = [1, 32], strides = [1, 1]} : vector<8x128xf32> to vector<1x32xf32>
    %cst = arith.constant dense<0.000000e+00> : vector<16xf32>
    %13 = vector.multi_reduction <add>, %1, %cst [1] : vector<16x32xf32> to vector<16xf32>
    %14 = vector.shape_cast %13 : vector<16xf32> to vector<16x1xf32>
    %cst_7 = arith.constant 3.200000e+01 : f32
    %15 = vector.broadcast %cst_7 : f32 to vector<16x1xf32>
    %16 = arith.divf %14, %15 : vector<16x1xf32>
    %17 = vector.broadcast %16 : vector<16x1xf32> to vector<16x32xf32>
    %18 = arith.subf %1, %17 : vector<16x32xf32>
    %19 = arith.mulf %18, %18 : vector<16x32xf32>
    %cst_8 = arith.constant dense<0.000000e+00> : vector<16xf32>
    %20 = vector.multi_reduction <add>, %19, %cst_8 [1] : vector<16x32xf32> to vector<16xf32>
    %21 = vector.shape_cast %20 : vector<16xf32> to vector<16x1xf32>
    %cst_9 = arith.constant 3.200000e+01 : f32
    %22 = vector.broadcast %cst_9 : f32 to vector<16x1xf32>
    %23 = arith.divf %21, %22 : vector<16x1xf32>
    %24 = vector.broadcast %16 : vector<16x1xf32> to vector<16x32xf32>
    %25 = arith.subf %1, %24 : vector<16x32xf32>
    %cst_10 = arith.constant 9.99999974E-6 : f32
    %26 = vector.broadcast %cst_10 : f32 to vector<16x1xf32>
    %27 = arith.addf %23, %26 : vector<16x1xf32>
    %28 = math.rsqrt %27 : vector<16x1xf32>
    %29 = vector.broadcast %28 : vector<16x1xf32> to vector<16x32xf32>
    %30 = arith.mulf %25, %29 : vector<16x32xf32>
    %31 = vector.broadcast %5 : vector<1x32xf32> to vector<16x32xf32>
    %32 = arith.mulf %30, %31 : vector<16x32xf32>
    %33 = vector.broadcast %6 : vector<1x32xf32> to vector<16x32xf32>
    %34 = arith.addf %32, %33 : vector<16x32xf32>
    %35 = arith.truncf %34 : vector<16x32xf32> to vector<16x32xbf16>
    %c0_11 = arith.constant 0 : index
    %c0_12 = arith.constant 0 : index
    %c0_13 = arith.constant 0 : index
    %36 = vector.load %arg3[%c0_11, %c0_12, %c0_13] : memref<2x32x96xbf16, #tpu.memory_space<vmem>>, vector<1x32x96xbf16>
    %37 = vector.shape_cast %36 : vector<1x32x96xbf16> to vector<32x96xbf16>
    %cst_14 = arith.constant dense<0.000000e+00> : vector<16x96xf32>
    %38 = tpu.matmul %35, %37, %cst_14 {dimension_numbers = #tpu.dot_dimension_numbers<[1], [0], [0], [1], [0, 0, 1, 1], [], []>} : vector<16x32xbf16>, vector<32x96xbf16>, vector<16x96xf32> -> vector<16x96xf32>
    %39 = vector.broadcast %7 : vector<1x96xf32> to vector<16x96xf32>
    %40 = arith.addf %38, %39 : vector<16x96xf32>
    %41 = arith.truncf %40 : vector<16x96xf32> to vector<16x96xbf16>
    %42 = vector.extract_strided_slice %41 {offsets = [0, 0], sizes = [16, 8], strides = [1, 1]} : vector<16x96xbf16> to vector<16x8xbf16>
    %43 = vector.extract_strided_slice %41 {offsets = [0, 32], sizes = [16, 8], strides = [1, 1]} : vector<16x96xbf16> to vector<16x8xbf16>
    %44 = vector.extract_strided_slice %41 {offsets = [0, 64], sizes = [16, 8], strides = [1, 1]} : vector<16x96xbf16> to vector<16x8xbf16>
    %cst_15 = arith.constant dense<0.000000e+00> : vector<16x16xf32>
    %45 = tpu.matmul %42, %43, %cst_15 {dimension_numbers = #tpu.dot_dimension_numbers<[1], [1], [0], [0], [0, 0, 1, 0], [], []>} : vector<16x8xbf16>, vector<16x8xbf16>, vector<16x16xf32> -> vector<16x16xf32>
    %46 = arith.addf %45, %2 : vector<16x16xf32>
    %cst_16 = arith.constant dense<0xFF800000> : vector<16xf32>
    %47 = vector.multi_reduction <maximumf>, %46, %cst_16 [1] : vector<16x16xf32> to vector<16xf32>
    %48 = vector.shape_cast %47 : vector<16xf32> to vector<16x1xf32>
    %49 = vector.broadcast %48 : vector<16x1xf32> to vector<16x16xf32>
    %50 = arith.subf %46, %49 : vector<16x16xf32>
    %51 = math.exp %50 : vector<16x16xf32>
    %cst_17 = arith.constant dense<0.000000e+00> : vector<16xf32>
    %52 = vector.multi_reduction <add>, %51, %cst_17 [1] : vector<16x16xf32> to vector<16xf32>
    %53 = vector.shape_cast %52 : vector<16xf32> to vector<16x1xf32>
    %54 = tpu.reciprocal %53 {approx = true} : vector<16x1xf32> -> vector<16x1xf32>
    %55 = vector.broadcast %54 : vector<16x1xf32> to vector<16x16xf32>
    %56 = arith.mulf %51, %55 : vector<16x16xf32>
    %57 = arith.truncf %56 : vector<16x16xf32> to vector<16x16xbf16>
    %cst_18 = arith.constant dense<0.000000e+00> : vector<16x8xf32>
    %58 = tpu.matmul %57, %44, %cst_18 {dimension_numbers = #tpu.dot_dimension_numbers<[1], [0], [0], [1], [0, 0, 1, 1], [], []>} : vector<16x16xbf16>, vector<16x8xbf16>, vector<16x8xf32> -> vector<16x8xf32>
    %59 = vector.extract_strided_slice %41 {offsets = [0, 8], sizes = [16, 8], strides = [1, 1]} : vector<16x96xbf16> to vector<16x8xbf16>
    %60 = vector.extract_strided_slice %41 {offsets = [0, 40], sizes = [16, 8], strides = [1, 1]} : vector<16x96xbf16> to vector<16x8xbf16>
    %61 = vector.extract_strided_slice %41 {offsets = [0, 72], sizes = [16, 8], strides = [1, 1]} : vector<16x96xbf16> to vector<16x8xbf16>
    %cst_19 = arith.constant dense<0.000000e+00> : vector<16x16xf32>
    %62 = tpu.matmul %59, %60, %cst_19 {dimension_numbers = #tpu.dot_dimension_numbers<[1], [1], [0], [0], [0, 0, 1, 0], [], []>} : vector<16x8xbf16>, vector<16x8xbf16>, vector<16x16xf32> -> vector<16x16xf32>
    %63 = arith.addf %62, %2 : vector<16x16xf32>
    %cst_20 = arith.constant dense<0xFF800000> : vector<16xf32>
    %64 = vector.multi_reduction <maximumf>, %63, %cst_20 [1] : vector<16x16xf32> to vector<16xf32>
    %65 = vector.shape_cast %64 : vector<16xf32> to vector<16x1xf32>
    %66 = vector.broadcast %65 : vector<16x1xf32> to vector<16x16xf32>
    %67 = arith.subf %63, %66 : vector<16x16xf32>
    %68 = math.exp %67 : vector<16x16xf32>
    %cst_21 = arith.constant dense<0.000000e+00> : vector<16xf32>
    %69 = vector.multi_reduction <add>, %68, %cst_21 [1] : vector<16x16xf32> to vector<16xf32>
    %70 = vector.shape_cast %69 : vector<16xf32> to vector<16x1xf32>
    %71 = tpu.reciprocal %70 {approx = true} : vector<16x1xf32> -> vector<16x1xf32>
    %72 = vector.broadcast %71 : vector<16x1xf32> to vector<16x16xf32>
    %73 = arith.mulf %68, %72 : vector<16x16xf32>
    %74 = arith.truncf %73 : vector<16x16xf32> to vector<16x16xbf16>
    %cst_22 = arith.constant dense<0.000000e+00> : vector<16x8xf32>
    %75 = tpu.matmul %74, %61, %cst_22 {dimension_numbers = #tpu.dot_dimension_numbers<[1], [0], [0], [1], [0, 0, 1, 1], [], []>} : vector<16x16xbf16>, vector<16x8xbf16>, vector<16x8xf32> -> vector<16x8xf32>
    %76 = vector.extract_strided_slice %41 {offsets = [0, 16], sizes = [16, 8], strides = [1, 1]} : vector<16x96xbf16> to vector<16x8xbf16>
    %77 = vector.extract_strided_slice %41 {offsets = [0, 48], sizes = [16, 8], strides = [1, 1]} : vector<16x96xbf16> to vector<16x8xbf16>
    %78 = vector.extract_strided_slice %41 {offsets = [0, 80], sizes = [16, 8], strides = [1, 1]} : vector<16x96xbf16> to vector<16x8xbf16>
    %cst_23 = arith.constant dense<0.000000e+00> : vector<16x16xf32>
    %79 = tpu.matmul %76, %77, %cst_23 {dimension_numbers = #tpu.dot_dimension_numbers<[1], [1], [0], [0], [0, 0, 1, 0], [], []>} : vector<16x8xbf16>, vector<16x8xbf16>, vector<16x16xf32> -> vector<16x16xf32>
    %80 = arith.addf %79, %2 : vector<16x16xf32>
    %cst_24 = arith.constant dense<0xFF800000> : vector<16xf32>
    %81 = vector.multi_reduction <maximumf>, %80, %cst_24 [1] : vector<16x16xf32> to vector<16xf32>
    %82 = vector.shape_cast %81 : vector<16xf32> to vector<16x1xf32>
    %83 = vector.broadcast %82 : vector<16x1xf32> to vector<16x16xf32>
    %84 = arith.subf %80, %83 : vector<16x16xf32>
    %85 = math.exp %84 : vector<16x16xf32>
    %cst_25 = arith.constant dense<0.000000e+00> : vector<16xf32>
    %86 = vector.multi_reduction <add>, %85, %cst_25 [1] : vector<16x16xf32> to vector<16xf32>
    %87 = vector.shape_cast %86 : vector<16xf32> to vector<16x1xf32>
    %88 = tpu.reciprocal %87 {approx = true} : vector<16x1xf32> -> vector<16x1xf32>
    %89 = vector.broadcast %88 : vector<16x1xf32> to vector<16x16xf32>
    %90 = arith.mulf %85, %89 : vector<16x16xf32>
    %91 = arith.truncf %90 : vector<16x16xf32> to vector<16x16xbf16>
    %cst_26 = arith.constant dense<0.000000e+00> : vector<16x8xf32>
    %92 = tpu.matmul %91, %78, %cst_26 {dimension_numbers = #tpu.dot_dimension_numbers<[1], [0], [0], [1], [0, 0, 1, 1], [], []>} : vector<16x16xbf16>, vector<16x8xbf16>, vector<16x8xf32> -> vector<16x8xf32>
    %93 = vector.extract_strided_slice %41 {offsets = [0, 24], sizes = [16, 8], strides = [1, 1]} : vector<16x96xbf16> to vector<16x8xbf16>
    %94 = vector.extract_strided_slice %41 {offsets = [0, 56], sizes = [16, 8], strides = [1, 1]} : vector<16x96xbf16> to vector<16x8xbf16>
    %95 = vector.extract_strided_slice %41 {offsets = [0, 88], sizes = [16, 8], strides = [1, 1]} : vector<16x96xbf16> to vector<16x8xbf16>
    %cst_27 = arith.constant dense<0.000000e+00> : vector<16x16xf32>
    %96 = tpu.matmul %93, %94, %cst_27 {dimension_numbers = #tpu.dot_dimension_numbers<[1], [1], [0], [0], [0, 0, 1, 0], [], []>} : vector<16x8xbf16>, vector<16x8xbf16>, vector<16x16xf32> -> vector<16x16xf32>
    %97 = arith.addf %96, %2 : vector<16x16xf32>
    %cst_28 = arith.constant dense<0xFF800000> : vector<16xf32>
    %98 = vector.multi_reduction <maximumf>, %97, %cst_28 [1] : vector<16x16xf32> to vector<16xf32>
    %99 = vector.shape_cast %98 : vector<16xf32> to vector<16x1xf32>
    %100 = vector.broadcast %99 : vector<16x1xf32> to vector<16x16xf32>
    %101 = arith.subf %97, %100 : vector<16x16xf32>
    %102 = math.exp %101 : vector<16x16xf32>
    %cst_29 = arith.constant dense<0.000000e+00> : vector<16xf32>
    %103 = vector.multi_reduction <add>, %102, %cst_29 [1] : vector<16x16xf32> to vector<16xf32>
    %104 = vector.shape_cast %103 : vector<16xf32> to vector<16x1xf32>
    %105 = tpu.reciprocal %104 {approx = true} : vector<16x1xf32> -> vector<16x1xf32>
    %106 = vector.broadcast %105 : vector<16x1xf32> to vector<16x16xf32>
    %107 = arith.mulf %102, %106 : vector<16x16xf32>
    %108 = arith.truncf %107 : vector<16x16xf32> to vector<16x16xbf16>
    %cst_30 = arith.constant dense<0.000000e+00> : vector<16x8xf32>
    %109 = tpu.matmul %108, %95, %cst_30 {dimension_numbers = #tpu.dot_dimension_numbers<[1], [0], [0], [1], [0, 0, 1, 1], [], []>} : vector<16x16xbf16>, vector<16x8xbf16>, vector<16x8xf32> -> vector<16x8xf32>
    %110 = tpu.concatenate %58, %75, %92, %109 in 1 : vector<16x8xf32>, vector<16x8xf32>, vector<16x8xf32>, vector<16x8xf32> -> vector<16x32xf32>
    %111 = arith.truncf %110 : vector<16x32xf32> to vector<16x32xbf16>
    %c0_31 = arith.constant 0 : index
    %c0_32 = arith.constant 0 : index
    %c0_33 = arith.constant 0 : index
    %112 = vector.load %arg4[%c0_31, %c0_32, %c0_33] : memref<2x32x32xbf16, #tpu.memory_space<vmem>>, vector<1x32x32xbf16>
    %113 = vector.shape_cast %112 : vector<1x32x32xbf16> to vector<32x32xbf16>
    %cst_34 = arith.constant dense<0.000000e+00> : vector<16x32xf32>
    %114 = tpu.matmul %111, %113, %cst_34 {dimension_numbers = #tpu.dot_dimension_numbers<[1], [0], [0], [1], [0, 0, 1, 1], [], []>} : vector<16x32xbf16>, vector<32x32xbf16>, vector<16x32xf32> -> vector<16x32xf32>
    %115 = arith.addf %1, %114 : vector<16x32xf32>
    %116 = vector.broadcast %8 : vector<1x32xf32> to vector<16x32xf32>
    %117 = arith.addf %115, %116 : vector<16x32xf32>
    %cst_35 = arith.constant dense<0.000000e+00> : vector<16xf32>
    %118 = vector.multi_reduction <add>, %117, %cst_35 [1] : vector<16x32xf32> to vector<16xf32>
    %119 = vector.shape_cast %118 : vector<16xf32> to vector<16x1xf32>
    %cst_36 = arith.constant 3.200000e+01 : f32
    %120 = vector.broadcast %cst_36 : f32 to vector<16x1xf32>
    %121 = arith.divf %119, %120 : vector<16x1xf32>
    %122 = vector.broadcast %121 : vector<16x1xf32> to vector<16x32xf32>
    %123 = arith.subf %117, %122 : vector<16x32xf32>
    %124 = arith.mulf %123, %123 : vector<16x32xf32>
    %cst_37 = arith.constant dense<0.000000e+00> : vector<16xf32>
    %125 = vector.multi_reduction <add>, %124, %cst_37 [1] : vector<16x32xf32> to vector<16xf32>
    %126 = vector.shape_cast %125 : vector<16xf32> to vector<16x1xf32>
    %cst_38 = arith.constant 3.200000e+01 : f32
    %127 = vector.broadcast %cst_38 : f32 to vector<16x1xf32>
    %128 = arith.divf %126, %127 : vector<16x1xf32>
    %129 = vector.broadcast %121 : vector<16x1xf32> to vector<16x32xf32>
    %130 = arith.subf %117, %129 : vector<16x32xf32>
    %cst_39 = arith.constant 9.99999974E-6 : f32
    %131 = vector.broadcast %cst_39 : f32 to vector<16x1xf32>
    %132 = arith.addf %128, %131 : vector<16x1xf32>
    %133 = math.rsqrt %132 : vector<16x1xf32>
    %134 = vector.broadcast %133 : vector<16x1xf32> to vector<16x32xf32>
    %135 = arith.mulf %130, %134 : vector<16x32xf32>
    %136 = vector.broadcast %9 : vector<1x32xf32> to vector<16x32xf32>
    %137 = arith.mulf %135, %136 : vector<16x32xf32>
    %138 = vector.broadcast %10 : vector<1x32xf32> to vector<16x32xf32>
    %139 = arith.addf %137, %138 : vector<16x32xf32>
    %140 = arith.truncf %139 : vector<16x32xf32> to vector<16x32xbf16>
    %c0_40 = arith.constant 0 : index
    %c0_41 = arith.constant 0 : index
    %c0_42 = arith.constant 0 : index
    %141 = vector.load %arg5[%c0_40, %c0_41, %c0_42] : memref<2x32x128xbf16, #tpu.memory_space<vmem>>, vector<1x32x128xbf16>
    %142 = vector.shape_cast %141 : vector<1x32x128xbf16> to vector<32x128xbf16>
    %cst_43 = arith.constant dense<0.000000e+00> : vector<16x128xf32>
    %143 = tpu.matmul %140, %142, %cst_43 {dimension_numbers = #tpu.dot_dimension_numbers<[1], [0], [0], [1], [0, 0, 1, 1], [], []>} : vector<16x32xbf16>, vector<32x128xbf16>, vector<16x128xf32> -> vector<16x128xf32>
    %144 = vector.broadcast %11 : vector<1x128xf32> to vector<16x128xf32>
    %145 = arith.addf %143, %144 : vector<16x128xf32>
    %cst_44 = arith.constant 5.000000e-01 : f32
    %146 = vector.broadcast %cst_44 : f32 to vector<16x128xf32>
    %147 = arith.mulf %146, %145 : vector<16x128xf32>
    %cst_45 = arith.constant 0.636619746 : f32
    %148 = math.sqrt %cst_45 : f32
    %cst_46 = arith.constant 4.471500e-02 : f32
    %149 = vector.broadcast %cst_46 : f32 to vector<16x128xf32>
    %150 = arith.mulf %149, %145 : vector<16x128xf32>
    %151 = arith.mulf %150, %145 : vector<16x128xf32>
    %152 = arith.mulf %151, %145 : vector<16x128xf32>
    %153 = arith.addf %145, %152 : vector<16x128xf32>
    %154 = vector.broadcast %148 : f32 to vector<16x128xf32>
    %155 = arith.mulf %154, %153 : vector<16x128xf32>
    %156 = math.tanh %155 : vector<16x128xf32>
    %cst_47 = arith.constant 1.000000e+00 : f32
    %157 = vector.broadcast %cst_47 : f32 to vector<16x128xf32>
    %158 = arith.addf %157, %156 : vector<16x128xf32>
    %159 = arith.mulf %147, %158 : vector<16x128xf32>
    %160 = arith.truncf %159 : vector<16x128xf32> to vector<16x128xbf16>
    %c0_48 = arith.constant 0 : index
    %c0_49 = arith.constant 0 : index
    %c0_50 = arith.constant 0 : index
    %161 = vector.load %arg6[%c0_48, %c0_49, %c0_50] : memref<2x128x32xbf16, #tpu.memory_space<vmem>>, vector<1x128x32xbf16>
    %162 = vector.shape_cast %161 : vector<1x128x32xbf16> to vector<128x32xbf16>
    %cst_51 = arith.constant dense<0.000000e+00> : vector<16x32xf32>
    %163 = tpu.matmul %160, %162, %cst_51 {dimension_numbers = #tpu.dot_dimension_numbers<[1], [0], [0], [1], [0, 0, 1, 1], [], []>} : vector<16x128xbf16>, vector<128x32xbf16>, vector<16x32xf32> -> vector<16x32xf32>
    %164 = arith.addf %117, %163 : vector<16x32xf32>
    %165 = vector.broadcast %12 : vector<1x32xf32> to vector<16x32xf32>
    %166 = arith.addf %164, %165 : vector<16x32xf32>
    %c1 = arith.constant 1 : index
    %c0_52 = arith.constant 0 : index
    %c0_53 = arith.constant 0 : index
    %167 = vector.load %arg7[%c1, %c0_52, %c0_53] : memref<2x8x128xf32, #tpu.memory_space<vmem>>, vector<1x8x128xf32>
    %168 = vector.shape_cast %167 : vector<1x8x128xf32> to vector<8x128xf32>
    %169 = vector.extract_strided_slice %168 {offsets = [0, 0], sizes = [1, 32], strides = [1, 1]} : vector<8x128xf32> to vector<1x32xf32>
    %170 = vector.extract_strided_slice %168 {offsets = [1, 0], sizes = [1, 32], strides = [1, 1]} : vector<8x128xf32> to vector<1x32xf32>
    %171 = vector.extract_strided_slice %168 {offsets = [2, 0], sizes = [1, 96], strides = [1, 1]} : vector<8x128xf32> to vector<1x96xf32>
    %172 = vector.extract_strided_slice %168 {offsets = [3, 0], sizes = [1, 32], strides = [1, 1]} : vector<8x128xf32> to vector<1x32xf32>
    %173 = vector.extract_strided_slice %168 {offsets = [4, 0], sizes = [1, 32], strides = [1, 1]} : vector<8x128xf32> to vector<1x32xf32>
    %174 = vector.extract_strided_slice %168 {offsets = [5, 0], sizes = [1, 32], strides = [1, 1]} : vector<8x128xf32> to vector<1x32xf32>
    %175 = vector.extract_strided_slice %168 {offsets = [6, 0], sizes = [1, 128], strides = [1, 1]} : vector<8x128xf32> to vector<1x128xf32>
    %176 = vector.extract_strided_slice %168 {offsets = [7, 0], sizes = [1, 32], strides = [1, 1]} : vector<8x128xf32> to vector<1x32xf32>
    %cst_54 = arith.constant dense<0.000000e+00> : vector<16xf32>
    %177 = vector.multi_reduction <add>, %166, %cst_54 [1] : vector<16x32xf32> to vector<16xf32>
    %178 = vector.shape_cast %177 : vector<16xf32> to vector<16x1xf32>
    %cst_55 = arith.constant 3.200000e+01 : f32
    %179 = vector.broadcast %cst_55 : f32 to vector<16x1xf32>
    %180 = arith.divf %178, %179 : vector<16x1xf32>
    %181 = vector.broadcast %180 : vector<16x1xf32> to vector<16x32xf32>
    %182 = arith.subf %166, %181 : vector<16x32xf32>
    %183 = arith.mulf %182, %182 : vector<16x32xf32>
    %cst_56 = arith.constant dense<0.000000e+00> : vector<16xf32>
    %184 = vector.multi_reduction <add>, %183, %cst_56 [1] : vector<16x32xf32> to vector<16xf32>
    %185 = vector.shape_cast %184 : vector<16xf32> to vector<16x1xf32>
    %cst_57 = arith.constant 3.200000e+01 : f32
    %186 = vector.broadcast %cst_57 : f32 to vector<16x1xf32>
    %187 = arith.divf %185, %186 : vector<16x1xf32>
    %188 = vector.broadcast %180 : vector<16x1xf32> to vector<16x32xf32>
    %189 = arith.subf %166, %188 : vector<16x32xf32>
    %cst_58 = arith.constant 9.99999974E-6 : f32
    %190 = vector.broadcast %cst_58 : f32 to vector<16x1xf32>
    %191 = arith.addf %187, %190 : vector<16x1xf32>
    %192 = math.rsqrt %191 : vector<16x1xf32>
    %193 = vector.broadcast %192 : vector<16x1xf32> to vector<16x32xf32>
    %194 = arith.mulf %189, %193 : vector<16x32xf32>
    %195 = vector.broadcast %169 : vector<1x32xf32> to vector<16x32xf32>
    %196 = arith.mulf %194, %195 : vector<16x32xf32>
    %197 = vector.broadcast %170 : vector<1x32xf32> to vector<16x32xf32>
    %198 = arith.addf %196, %197 : vector<16x32xf32>
    %199 = arith.truncf %198 : vector<16x32xf32> to vector<16x32xbf16>
    %c1_59 = arith.constant 1 : index
    %c0_60 = arith.constant 0 : index
    %c0_61 = arith.constant 0 : index
    %200 = vector.load %arg3[%c1_59, %c0_60, %c0_61] : memref<2x32x96xbf16, #tpu.memory_space<vmem>>, vector<1x32x96xbf16>
    %201 = vector.shape_cast %200 : vector<1x32x96xbf16> to vector<32x96xbf16>
    %cst_62 = arith.constant dense<0.000000e+00> : vector<16x96xf32>
    %202 = tpu.matmul %199, %201, %cst_62 {dimension_numbers = #tpu.dot_dimension_numbers<[1], [0], [0], [1], [0, 0, 1, 1], [], []>} : vector<16x32xbf16>, vector<32x96xbf16>, vector<16x96xf32> -> vector<16x96xf32>
    %203 = vector.broadcast %171 : vector<1x96xf32> to vector<16x96xf32>
    %204 = arith.addf %202, %203 : vector<16x96xf32>
    %205 = arith.truncf %204 : vector<16x96xf32> to vector<16x96xbf16>
    %206 = vector.extract_strided_slice %205 {offsets = [0, 0], sizes = [16, 8], strides = [1, 1]} : vector<16x96xbf16> to vector<16x8xbf16>
    %207 = vector.extract_strided_slice %205 {offsets = [0, 32], sizes = [16, 8], strides = [1, 1]} : vector<16x96xbf16> to vector<16x8xbf16>
    %208 = vector.extract_strided_slice %205 {offsets = [0, 64], sizes = [16, 8], strides = [1, 1]} : vector<16x96xbf16> to vector<16x8xbf16>
    %cst_63 = arith.constant dense<0.000000e+00> : vector<16x16xf32>
    %209 = tpu.matmul %206, %207, %cst_63 {dimension_numbers = #tpu.dot_dimension_numbers<[1], [1], [0], [0], [0, 0, 1, 0], [], []>} : vector<16x8xbf16>, vector<16x8xbf16>, vector<16x16xf32> -> vector<16x16xf32>
    %210 = arith.addf %209, %2 : vector<16x16xf32>
    %cst_64 = arith.constant dense<0xFF800000> : vector<16xf32>
    %211 = vector.multi_reduction <maximumf>, %210, %cst_64 [1] : vector<16x16xf32> to vector<16xf32>
    %212 = vector.shape_cast %211 : vector<16xf32> to vector<16x1xf32>
    %213 = vector.broadcast %212 : vector<16x1xf32> to vector<16x16xf32>
    %214 = arith.subf %210, %213 : vector<16x16xf32>
    %215 = math.exp %214 : vector<16x16xf32>
    %cst_65 = arith.constant dense<0.000000e+00> : vector<16xf32>
    %216 = vector.multi_reduction <add>, %215, %cst_65 [1] : vector<16x16xf32> to vector<16xf32>
    %217 = vector.shape_cast %216 : vector<16xf32> to vector<16x1xf32>
    %218 = tpu.reciprocal %217 {approx = true} : vector<16x1xf32> -> vector<16x1xf32>
    %219 = vector.broadcast %218 : vector<16x1xf32> to vector<16x16xf32>
    %220 = arith.mulf %215, %219 : vector<16x16xf32>
    %221 = arith.truncf %220 : vector<16x16xf32> to vector<16x16xbf16>
    %cst_66 = arith.constant dense<0.000000e+00> : vector<16x8xf32>
    %222 = tpu.matmul %221, %208, %cst_66 {dimension_numbers = #tpu.dot_dimension_numbers<[1], [0], [0], [1], [0, 0, 1, 1], [], []>} : vector<16x16xbf16>, vector<16x8xbf16>, vector<16x8xf32> -> vector<16x8xf32>
    %223 = vector.extract_strided_slice %205 {offsets = [0, 8], sizes = [16, 8], strides = [1, 1]} : vector<16x96xbf16> to vector<16x8xbf16>
    %224 = vector.extract_strided_slice %205 {offsets = [0, 40], sizes = [16, 8], strides = [1, 1]} : vector<16x96xbf16> to vector<16x8xbf16>
    %225 = vector.extract_strided_slice %205 {offsets = [0, 72], sizes = [16, 8], strides = [1, 1]} : vector<16x96xbf16> to vector<16x8xbf16>
    %cst_67 = arith.constant dense<0.000000e+00> : vector<16x16xf32>
    %226 = tpu.matmul %223, %224, %cst_67 {dimension_numbers = #tpu.dot_dimension_numbers<[1], [1], [0], [0], [0, 0, 1, 0], [], []>} : vector<16x8xbf16>, vector<16x8xbf16>, vector<16x16xf32> -> vector<16x16xf32>
    %227 = arith.addf %226, %2 : vector<16x16xf32>
    %cst_68 = arith.constant dense<0xFF800000> : vector<16xf32>
    %228 = vector.multi_reduction <maximumf>, %227, %cst_68 [1] : vector<16x16xf32> to vector<16xf32>
    %229 = vector.shape_cast %228 : vector<16xf32> to vector<16x1xf32>
    %230 = vector.broadcast %229 : vector<16x1xf32> to vector<16x16xf32>
    %231 = arith.subf %227, %230 : vector<16x16xf32>
    %232 = math.exp %231 : vector<16x16xf32>
    %cst_69 = arith.constant dense<0.000000e+00> : vector<16xf32>
    %233 = vector.multi_reduction <add>, %232, %cst_69 [1] : vector<16x16xf32> to vector<16xf32>
    %234 = vector.shape_cast %233 : vector<16xf32> to vector<16x1xf32>
    %235 = tpu.reciprocal %234 {approx = true} : vector<16x1xf32> -> vector<16x1xf32>
    %236 = vector.broadcast %235 : vector<16x1xf32> to vector<16x16xf32>
    %237 = arith.mulf %232, %236 : vector<16x16xf32>
    %238 = arith.truncf %237 : vector<16x16xf32> to vector<16x16xbf16>
    %cst_70 = arith.constant dense<0.000000e+00> : vector<16x8xf32>
    %239 = tpu.matmul %238, %225, %cst_70 {dimension_numbers = #tpu.dot_dimension_numbers<[1], [0], [0], [1], [0, 0, 1, 1], [], []>} : vector<16x16xbf16>, vector<16x8xbf16>, vector<16x8xf32> -> vector<16x8xf32>
    %240 = vector.extract_strided_slice %205 {offsets = [0, 16], sizes = [16, 8], strides = [1, 1]} : vector<16x96xbf16> to vector<16x8xbf16>
    %241 = vector.extract_strided_slice %205 {offsets = [0, 48], sizes = [16, 8], strides = [1, 1]} : vector<16x96xbf16> to vector<16x8xbf16>
    %242 = vector.extract_strided_slice %205 {offsets = [0, 80], sizes = [16, 8], strides = [1, 1]} : vector<16x96xbf16> to vector<16x8xbf16>
    %cst_71 = arith.constant dense<0.000000e+00> : vector<16x16xf32>
    %243 = tpu.matmul %240, %241, %cst_71 {dimension_numbers = #tpu.dot_dimension_numbers<[1], [1], [0], [0], [0, 0, 1, 0], [], []>} : vector<16x8xbf16>, vector<16x8xbf16>, vector<16x16xf32> -> vector<16x16xf32>
    %244 = arith.addf %243, %2 : vector<16x16xf32>
    %cst_72 = arith.constant dense<0xFF800000> : vector<16xf32>
    %245 = vector.multi_reduction <maximumf>, %244, %cst_72 [1] : vector<16x16xf32> to vector<16xf32>
    %246 = vector.shape_cast %245 : vector<16xf32> to vector<16x1xf32>
    %247 = vector.broadcast %246 : vector<16x1xf32> to vector<16x16xf32>
    %248 = arith.subf %244, %247 : vector<16x16xf32>
    %249 = math.exp %248 : vector<16x16xf32>
    %cst_73 = arith.constant dense<0.000000e+00> : vector<16xf32>
    %250 = vector.multi_reduction <add>, %249, %cst_73 [1] : vector<16x16xf32> to vector<16xf32>
    %251 = vector.shape_cast %250 : vector<16xf32> to vector<16x1xf32>
    %252 = tpu.reciprocal %251 {approx = true} : vector<16x1xf32> -> vector<16x1xf32>
    %253 = vector.broadcast %252 : vector<16x1xf32> to vector<16x16xf32>
    %254 = arith.mulf %249, %253 : vector<16x16xf32>
    %255 = arith.truncf %254 : vector<16x16xf32> to vector<16x16xbf16>
    %cst_74 = arith.constant dense<0.000000e+00> : vector<16x8xf32>
    %256 = tpu.matmul %255, %242, %cst_74 {dimension_numbers = #tpu.dot_dimension_numbers<[1], [0], [0], [1], [0, 0, 1, 1], [], []>} : vector<16x16xbf16>, vector<16x8xbf16>, vector<16x8xf32> -> vector<16x8xf32>
    %257 = vector.extract_strided_slice %205 {offsets = [0, 24], sizes = [16, 8], strides = [1, 1]} : vector<16x96xbf16> to vector<16x8xbf16>
    %258 = vector.extract_strided_slice %205 {offsets = [0, 56], sizes = [16, 8], strides = [1, 1]} : vector<16x96xbf16> to vector<16x8xbf16>
    %259 = vector.extract_strided_slice %205 {offsets = [0, 88], sizes = [16, 8], strides = [1, 1]} : vector<16x96xbf16> to vector<16x8xbf16>
    %cst_75 = arith.constant dense<0.000000e+00> : vector<16x16xf32>
    %260 = tpu.matmul %257, %258, %cst_75 {dimension_numbers = #tpu.dot_dimension_numbers<[1], [1], [0], [0], [0, 0, 1, 0], [], []>} : vector<16x8xbf16>, vector<16x8xbf16>, vector<16x16xf32> -> vector<16x16xf32>
    %261 = arith.addf %260, %2 : vector<16x16xf32>
    %cst_76 = arith.constant dense<0xFF800000> : vector<16xf32>
    %262 = vector.multi_reduction <maximumf>, %261, %cst_76 [1] : vector<16x16xf32> to vector<16xf32>
    %263 = vector.shape_cast %262 : vector<16xf32> to vector<16x1xf32>
    %264 = vector.broadcast %263 : vector<16x1xf32> to vector<16x16xf32>
    %265 = arith.subf %261, %264 : vector<16x16xf32>
    %266 = math.exp %265 : vector<16x16xf32>
    %cst_77 = arith.constant dense<0.000000e+00> : vector<16xf32>
    %267 = vector.multi_reduction <add>, %266, %cst_77 [1] : vector<16x16xf32> to vector<16xf32>
    %268 = vector.shape_cast %267 : vector<16xf32> to vector<16x1xf32>
    %269 = tpu.reciprocal %268 {approx = true} : vector<16x1xf32> -> vector<16x1xf32>
    %270 = vector.broadcast %269 : vector<16x1xf32> to vector<16x16xf32>
    %271 = arith.mulf %266, %270 : vector<16x16xf32>
    %272 = arith.truncf %271 : vector<16x16xf32> to vector<16x16xbf16>
    %cst_78 = arith.constant dense<0.000000e+00> : vector<16x8xf32>
    %273 = tpu.matmul %272, %259, %cst_78 {dimension_numbers = #tpu.dot_dimension_numbers<[1], [0], [0], [1], [0, 0, 1, 1], [], []>} : vector<16x16xbf16>, vector<16x8xbf16>, vector<16x8xf32> -> vector<16x8xf32>
    %274 = tpu.concatenate %222, %239, %256, %273 in 1 : vector<16x8xf32>, vector<16x8xf32>, vector<16x8xf32>, vector<16x8xf32> -> vector<16x32xf32>
    %275 = arith.truncf %274 : vector<16x32xf32> to vector<16x32xbf16>
    %c1_79 = arith.constant 1 : index
    %c0_80 = arith.constant 0 : index
    %c0_81 = arith.constant 0 : index
    %276 = vector.load %arg4[%c1_79, %c0_80, %c0_81] : memref<2x32x32xbf16, #tpu.memory_space<vmem>>, vector<1x32x32xbf16>
    %277 = vector.shape_cast %276 : vector<1x32x32xbf16> to vector<32x32xbf16>
    %cst_82 = arith.constant dense<0.000000e+00> : vector<16x32xf32>
    %278 = tpu.matmul %275, %277, %cst_82 {dimension_numbers = #tpu.dot_dimension_numbers<[1], [0], [0], [1], [0, 0, 1, 1], [], []>} : vector<16x32xbf16>, vector<32x32xbf16>, vector<16x32xf32> -> vector<16x32xf32>
    %279 = arith.addf %166, %278 : vector<16x32xf32>
    %280 = vector.broadcast %172 : vector<1x32xf32> to vector<16x32xf32>
    %281 = arith.addf %279, %280 : vector<16x32xf32>
    %cst_83 = arith.constant dense<0.000000e+00> : vector<16xf32>
    %282 = vector.multi_reduction <add>, %281, %cst_83 [1] : vector<16x32xf32> to vector<16xf32>
    %283 = vector.shape_cast %282 : vector<16xf32> to vector<16x1xf32>
    %cst_84 = arith.constant 3.200000e+01 : f32
    %284 = vector.broadcast %cst_84 : f32 to vector<16x1xf32>
    %285 = arith.divf %283, %284 : vector<16x1xf32>
    %286 = vector.broadcast %285 : vector<16x1xf32> to vector<16x32xf32>
    %287 = arith.subf %281, %286 : vector<16x32xf32>
    %288 = arith.mulf %287, %287 : vector<16x32xf32>
    %cst_85 = arith.constant dense<0.000000e+00> : vector<16xf32>
    %289 = vector.multi_reduction <add>, %288, %cst_85 [1] : vector<16x32xf32> to vector<16xf32>
    %290 = vector.shape_cast %289 : vector<16xf32> to vector<16x1xf32>
    %cst_86 = arith.constant 3.200000e+01 : f32
    %291 = vector.broadcast %cst_86 : f32 to vector<16x1xf32>
    %292 = arith.divf %290, %291 : vector<16x1xf32>
    %293 = vector.broadcast %285 : vector<16x1xf32> to vector<16x32xf32>
    %294 = arith.subf %281, %293 : vector<16x32xf32>
    %cst_87 = arith.constant 9.99999974E-6 : f32
    %295 = vector.broadcast %cst_87 : f32 to vector<16x1xf32>
    %296 = arith.addf %292, %295 : vector<16x1xf32>
    %297 = math.rsqrt %296 : vector<16x1xf32>
    %298 = vector.broadcast %297 : vector<16x1xf32> to vector<16x32xf32>
    %299 = arith.mulf %294, %298 : vector<16x32xf32>
    %300 = vector.broadcast %173 : vector<1x32xf32> to vector<16x32xf32>
    %301 = arith.mulf %299, %300 : vector<16x32xf32>
    %302 = vector.broadcast %174 : vector<1x32xf32> to vector<16x32xf32>
    %303 = arith.addf %301, %302 : vector<16x32xf32>
    %304 = arith.truncf %303 : vector<16x32xf32> to vector<16x32xbf16>
    %c1_88 = arith.constant 1 : index
    %c0_89 = arith.constant 0 : index
    %c0_90 = arith.constant 0 : index
    %305 = vector.load %arg5[%c1_88, %c0_89, %c0_90] : memref<2x32x128xbf16, #tpu.memory_space<vmem>>, vector<1x32x128xbf16>
    %306 = vector.shape_cast %305 : vector<1x32x128xbf16> to vector<32x128xbf16>
    %cst_91 = arith.constant dense<0.000000e+00> : vector<16x128xf32>
    %307 = tpu.matmul %304, %306, %cst_91 {dimension_numbers = #tpu.dot_dimension_numbers<[1], [0], [0], [1], [0, 0, 1, 1], [], []>} : vector<16x32xbf16>, vector<32x128xbf16>, vector<16x128xf32> -> vector<16x128xf32>
    %308 = vector.broadcast %175 : vector<1x128xf32> to vector<16x128xf32>
    %309 = arith.addf %307, %308 : vector<16x128xf32>
    %cst_92 = arith.constant 5.000000e-01 : f32
    %310 = vector.broadcast %cst_92 : f32 to vector<16x128xf32>
    %311 = arith.mulf %310, %309 : vector<16x128xf32>
    %cst_93 = arith.constant 0.636619746 : f32
    %312 = math.sqrt %cst_93 : f32
    %cst_94 = arith.constant 4.471500e-02 : f32
    %313 = vector.broadcast %cst_94 : f32 to vector<16x128xf32>
    %314 = arith.mulf %313, %309 : vector<16x128xf32>
    %315 = arith.mulf %314, %309 : vector<16x128xf32>
    %316 = arith.mulf %315, %309 : vector<16x128xf32>
    %317 = arith.addf %309, %316 : vector<16x128xf32>
    %318 = vector.broadcast %312 : f32 to vector<16x128xf32>
    %319 = arith.mulf %318, %317 : vector<16x128xf32>
    %320 = math.tanh %319 : vector<16x128xf32>
    %cst_95 = arith.constant 1.000000e+00 : f32
    %321 = vector.broadcast %cst_95 : f32 to vector<16x128xf32>
    %322 = arith.addf %321, %320 : vector<16x128xf32>
    %323 = arith.mulf %311, %322 : vector<16x128xf32>
    %324 = arith.truncf %323 : vector<16x128xf32> to vector<16x128xbf16>
    %c1_96 = arith.constant 1 : index
    %c0_97 = arith.constant 0 : index
    %c0_98 = arith.constant 0 : index
    %325 = vector.load %arg6[%c1_96, %c0_97, %c0_98] : memref<2x128x32xbf16, #tpu.memory_space<vmem>>, vector<1x128x32xbf16>
    %326 = vector.shape_cast %325 : vector<1x128x32xbf16> to vector<128x32xbf16>
    %cst_99 = arith.constant dense<0.000000e+00> : vector<16x32xf32>
    %327 = tpu.matmul %324, %326, %cst_99 {dimension_numbers = #tpu.dot_dimension_numbers<[1], [0], [0], [1], [0, 0, 1, 1], [], []>} : vector<16x128xbf16>, vector<128x32xbf16>, vector<16x32xf32> -> vector<16x32xf32>
    %328 = arith.addf %281, %327 : vector<16x32xf32>
    %329 = vector.broadcast %176 : vector<1x32xf32> to vector<16x32xf32>
    %330 = arith.addf %328, %329 : vector<16x32xf32>
    %c0_100 = arith.constant 0 : index
    %c0_101 = arith.constant 0 : index
    %331 = vector.load %arg8[%c0_100, %c0_101] : memref<2x32xf32, #tpu.memory_space<vmem>>, vector<2x32xf32>
    %332 = vector.extract_strided_slice %331 {offsets = [0, 0], sizes = [1, 32], strides = [1, 1]} : vector<2x32xf32> to vector<1x32xf32>
    %333 = vector.extract_strided_slice %331 {offsets = [1, 0], sizes = [1, 32], strides = [1, 1]} : vector<2x32xf32> to vector<1x32xf32>
    %cst_102 = arith.constant dense<0.000000e+00> : vector<16xf32>
    %334 = vector.multi_reduction <add>, %330, %cst_102 [1] : vector<16x32xf32> to vector<16xf32>
    %335 = vector.shape_cast %334 : vector<16xf32> to vector<16x1xf32>
    %cst_103 = arith.constant 3.200000e+01 : f32
    %336 = vector.broadcast %cst_103 : f32 to vector<16x1xf32>
    %337 = arith.divf %335, %336 : vector<16x1xf32>
    %338 = vector.broadcast %337 : vector<16x1xf32> to vector<16x32xf32>
    %339 = arith.subf %330, %338 : vector<16x32xf32>
    %340 = arith.mulf %339, %339 : vector<16x32xf32>
    %cst_104 = arith.constant dense<0.000000e+00> : vector<16xf32>
    %341 = vector.multi_reduction <add>, %340, %cst_104 [1] : vector<16x32xf32> to vector<16xf32>
    %342 = vector.shape_cast %341 : vector<16xf32> to vector<16x1xf32>
    %cst_105 = arith.constant 3.200000e+01 : f32
    %343 = vector.broadcast %cst_105 : f32 to vector<16x1xf32>
    %344 = arith.divf %342, %343 : vector<16x1xf32>
    %345 = vector.broadcast %337 : vector<16x1xf32> to vector<16x32xf32>
    %346 = arith.subf %330, %345 : vector<16x32xf32>
    %cst_106 = arith.constant 9.99999974E-6 : f32
    %347 = vector.broadcast %cst_106 : f32 to vector<16x1xf32>
    %348 = arith.addf %344, %347 : vector<16x1xf32>
    %349 = math.rsqrt %348 : vector<16x1xf32>
    %350 = vector.broadcast %349 : vector<16x1xf32> to vector<16x32xf32>
    %351 = arith.mulf %346, %350 : vector<16x32xf32>
    %352 = vector.broadcast %332 : vector<1x32xf32> to vector<16x32xf32>
    %353 = arith.mulf %351, %352 : vector<16x32xf32>
    %354 = vector.broadcast %333 : vector<1x32xf32> to vector<16x32xf32>
    %355 = arith.addf %353, %354 : vector<16x32xf32>
    %356 = arith.truncf %355 : vector<16x32xf32> to vector<16x32xbf16>
    %c0_107 = arith.constant 0 : index
    %c0_108 = arith.constant 0 : index
    %357 = vector.load %arg9[%c0_107, %c0_108] : memref<32x128xbf16, #tpu.memory_space<vmem>>, vector<32x128xbf16>
    %cst_109 = arith.constant dense<0.000000e+00> : vector<16x128xf32>
    %358 = tpu.matmul %356, %357, %cst_109 {dimension_numbers = #tpu.dot_dimension_numbers<[1], [0], [0], [1], [0, 0, 1, 1], [], []>} : vector<16x32xbf16>, vector<32x128xbf16>, vector<16x128xf32> -> vector<16x128xf32>
    %c0_110 = arith.constant 0 : index
    %c0_111 = arith.constant 0 : index
    %c0_112 = arith.constant 0 : index
    %359 = vector.load %arg10[%c0_110, %c0_111, %c0_112] : memref<1x16x128xf32, #tpu.memory_space<vmem>>, vector<1x16x128xf32>
    %360 = vector.shape_cast %359 : vector<1x16x128xf32> to vector<16x128xf32>
    %361 = vector.shape_cast %358 : vector<16x128xf32> to vector<1x16x128xf32>
    tpu.vector_store %arg10[%c0_110, %c0_111, %c0_112], %361 {strides = array<i32>} : memref<1x16x128xf32, #tpu.memory_space<vmem>>, vector<1x16x128xf32>,
    return
  }
  func.func @transform_0(%arg0: i32) -> (i32, i32, i32) {
    %c0_i32 = arith.constant 0 : i32
    %c0_i32_0 = arith.constant 0 : i32
    %c0_i32_1 = arith.constant 0 : i32
    return %arg0, %c0_i32, %c0_i32_0 : i32, i32, i32
  }
  func.func @transform_1(%arg0: i32) -> (i32, i32) {
    %c0_i32 = arith.constant 0 : i32
    %c0_i32_0 = arith.constant 0 : i32
    %c0_i32_1 = arith.constant 0 : i32
    return %c0_i32, %c0_i32_0 : i32, i32
  }
  func.func @transform_2(%arg0: i32) -> (i32, i32, i32) {
    %c0_i32 = arith.constant 0 : i32
    %c0_i32_0 = arith.constant 0 : i32
    %c0_i32_1 = arith.constant 0 : i32
    %c0_i32_2 = arith.constant 0 : i32
    return %c0_i32, %c0_i32_0, %c0_i32_1 : i32, i32, i32
  }
  func.func @transform_3(%arg0: i32) -> (i32, i32, i32) {
    %c0_i32 = arith.constant 0 : i32
    %c0_i32_0 = arith.constant 0 : i32
    %c0_i32_1 = arith.constant 0 : i32
    %c0_i32_2 = arith.constant 0 : i32
    return %c0_i32, %c0_i32_0, %c0_i32_1 : i32, i32, i32
  }
  func.func @transform_4(%arg0: i32) -> (i32, i32, i32) {
    %c0_i32 = arith.constant 0 : i32
    %c0_i32_0 = arith.constant 0 : i32
    %c0_i32_1 = arith.constant 0 : i32
    %c0_i32_2 = arith.constant 0 : i32
    return %c0_i32, %c0_i32_0, %c0_i32_1 : i32, i32, i32
  }
  func.func @transform_5(%arg0: i32) -> (i32, i32, i32) {
    %c0_i32 = arith.constant 0 : i32
    %c0_i32_0 = arith.constant 0 : i32
    %c0_i32_1 = arith.constant 0 : i32
    %c0_i32_2 = arith.constant 0 : i32
    return %c0_i32, %c0_i32_0, %c0_i32_1 : i32, i32, i32
  }
  func.func @transform_6(%arg0: i32) -> (i32, i32, i32) {
    %c0_i32 = arith.constant 0 : i32
    %c0_i32_0 = arith.constant 0 : i32
    %c0_i32_1 = arith.constant 0 : i32
    %c0_i32_2 = arith.constant 0 : i32
    return %c0_i32, %c0_i32_0, %c0_i32_1 : i32, i32, i32
  }
  func.func @transform_7(%arg0: i32) -> (i32, i32) {
    %c0_i32 = arith.constant 0 : i32
    %c0_i32_0 = arith.constant 0 : i32
    %c0_i32_1 = arith.constant 0 : i32
    return %c0_i32, %c0_i32_0 : i32, i32
  }
  func.func @transform_8(%arg0: i32) -> (i32, i32) {
    %c0_i32 = arith.constant 0 : i32
    %c0_i32_0 = arith.constant 0 : i32
    %c0_i32_1 = arith.constant 0 : i32
    return %c0_i32, %c0_i32_0 : i32, i32
  }
  func.func @transform_9(%arg0: i32) -> (i32, i32, i32) {
    %c0_i32 = arith.constant 0 : i32
    %c0_i32_0 = arith.constant 0 : i32
    %c0_i32_1 = arith.constant 0 : i32
    return %arg0, %c0_i32, %c0_i32_0 : i32, i32, i32
  }
}

</mosaic_0001>

<llo_original>
// kernel: clip_caption_forward.1
$region0: #{clip_caption_forward.1}
  #allocation0 [shape = 'u32[]', space=smem, size = 0x4, offset = 0x4, fixed_abs, tag = 'smem constant byte address 0x4 - core index']
  #allocation1 [shape = 'u32[72,128]{1,0:T(1,128)}', space=vmem, size = 0x9000, scoped, tag = 'internal scratch']
  %s0 = inlined_call_operand.vmem [shape: f32[2,16,32], index: 0, kind: input, shape index: {}]
  %s1 = inlined_call_operand.vmem [shape: f32[16,16], index: 1, kind: input, shape index: {}]
  %s2 = inlined_call_operand.vmem [shape: bf16[2,32,96], index: 2, kind: input, shape index: {}]
  %s3 = inlined_call_operand.vmem [shape: bf16[2,32,32], index: 3, kind: input, shape index: {}]
  %s4 = inlined_call_operand.vmem [shape: bf16[2,32,128], index: 4, kind: input, shape index: {}]
  %s5 = inlined_call_operand.vmem [shape: bf16[2,128,32], index: 5, kind: input, shape index: {}]
  %s6 = inlined_call_operand.vmem [shape: f32[2,8,128], index: 6, kind: input, shape index: {}]
  %s7 = inlined_call_operand.vmem [shape: f32[2,32], index: 7, kind: input, shape index: {}]
  %s8 = inlined_call_operand.vmem [shape: bf16[32,128], index: 8, kind: input, shape index: {}]
  %s9 = inlined_call_operand.vmem [shape: f32[2,16,128], index: 9, kind: output, shape index: {}]
  %s10 = sld [smem:[#allocation0]]
  $region69: #{clip_caption_forward.1} parent=0
    _
  %s12 = ssub.s32 1, %s10
  %s13 = scalar_select 0, %s12, %s10
  loop: start=0, step=1, limit=4
  $region2: #{clip_caption_forward.1} parent=0 // loop_pre_header
    _
  $region3: #{clip_caption_forward.1} parent=0 // loop_header
    %s15 = sphi 0, %s19
    %p16 = scmp.ge.s32.totalorder %s15, 4
    %s25 = sphi 0, %s27
    %s28 = sphi 0, %s25
    %s29 = sphi 0, %s28
    %s45 = sphi 0, %s29
    %s49 = sphi 0, %s49
    %s51 = sphi 0, %s49
    %s52 = sphi 0, %s51
    %s66 = sphi 0, %s52
    %s70 = sphi 0, %s70
    %s72 = sphi 0, %s70
    %s73 = sphi 0, %s72
    %s87 = sphi 0, %s73
    %s91 = sphi 0, %s91
    %s93 = sphi 0, %s91
    %s94 = sphi 0, %s93
    %s108 = sphi 0, %s94
    %s112 = sphi 0, %s112
    %s114 = sphi 0, %s112
    %s115 = sphi 0, %s114
    %s129 = sphi 0, %s115
    %s133 = sphi 0, %s133
    %s135 = sphi 0, %s133
    %s136 = sphi 0, %s135
    %s150 = sphi 0, %s136
    %s154 = sphi 0, %s154
    %s156 = sphi 0, %s154
    %s157 = sphi 0, %s156
    %s171 = sphi 0, %s157
    %s175 = sphi 0, %s175
    %s177 = sphi 0, %s175
    %s178 = sphi 0, %s177
    %s192 = sphi 0, %s178
    %s196 = sphi 0, %s196
    %s198 = sphi 0, %s196
    %s199 = sphi 0, %s198
    %s213 = sphi 0, %s199
    %s219 = sphi 0, %s221
    %s222 = sphi 0, %s219
    %s223 = sphi 0, %s222
    %s239 = sphi 0, %s223
  $region4: #{clip_caption_forward.1} parent=0 // loop_header_branch
    %18 = sbr.rel (%p16) target = $region8
  $region5: #{clip_caption_forward.1} parent=0 // loop_body
    %s20 = ssub.s32 %s15, 1
    %s21 = ssub.s32 %s15, 2
    %s22 = sadd.s32 %s15, 1
    %s23 = ssub.s32 %s15, %s22
    %p24 = scmp.eq.s32.totalorder %s23, 0
    %s26 = sadd.s32 %s25, 1
    %s27 = scalar_select %p24, %s25, %s26
    %p30 = pneg %p24
    %p31 = scmp.eq.s32.totalorder %s15, 1
    %p32 = por %p30, %p31
    %p33 = scmp.ne.s32.totalorder %s25, %s28
    %p34 = scmp.eq.s32.totalorder %s15, 0
    %p35 = por %p33, %p34
    %p36 = scmp.ne.s32.totalorder %s25, %s28
    %p37 = scmp.eq.s32.totalorder %s20, 1
    %p38 = por %p36, %p37
    %p39 = scmp.ne.s32.totalorder %s28, %s29
    %p40 = scmp.eq.s32.totalorder %s20, 0
    %p41 = por %p39, %p40
    %p42 = scmp.ne.s32.totalorder %s28, %s29
    %p43 = scmp.eq.s32.totalorder %s21, 1
    %p44 = por %p42, %p43
    %p46 = scmp.ne.s32.totalorder %s29, %s45
    %p47 = scmp.eq.s32.totalorder %s21, 0
    %p48 = por %p46, %p47
    %s50 = sadd.s32 %s49, 1
    %p53 = scmp.eq.s32.totalorder %s15, 1
    %p54 = scmp.ne.s32.totalorder %s49, %s51
    %p55 = scmp.eq.s32.totalorder %s15, 0
    %p56 = por %p54, %p55
    %p57 = scmp.ne.s32.totalorder %s49, %s51
    %p58 = scmp.eq.s32.totalorder %s20, 1
    %p59 = por %p57, %p58
    %p60 = scmp.ne.s32.totalorder %s51, %s52
    %p61 = scmp.eq.s32.totalorder %s20, 0
    %p62 = por %p60, %p61
    %p63 = scmp.ne.s32.totalorder %s51, %s52
    %p64 = scmp.eq.s32.totalorder %s21, 1
    %p65 = por %p63, %p64
    %p67 = scmp.ne.s32.totalorder %s52, %s66
    %p68 = scmp.eq.s32.totalorder %s21, 0
    %p69 = por %p67, %p68
    %s71 = sadd.s32 %s70, 1
    %p74 = scmp.eq.s32.totalorder %s15, 1
    %p75 = scmp.ne.s32.totalorder %s70, %s72
    %p76 = scmp.eq.s32.totalorder %s15, 0
    %p77 = por %p75, %p76
    %p78 = scmp.ne.s32.totalorder %s70, %s72
    %p79 = scmp.eq.s32.totalorder %s20, 1
    %p80 = por %p78, %p79
    %p81 = scmp.ne.s32.totalorder %s72, %s73
    %p82 = scmp.eq.s32.totalorder %s20, 0
    %p83 = por %p81, %p82
    %p84 = scmp.ne.s32.totalorder %s72, %s73
    %p85 = scmp.eq.s32.totalorder %s21, 1
    %p86 = por %p84, %p85
    %p88 = scmp.ne.s32.totalorder %s73, %s87
    %p89 = scmp.eq.s32.totalorder %s21, 0
    %p90 = por %p88, %p89
    %s92 = sadd.s32 %s91, 1
    %p95 = scmp.eq.s32.totalorder %s15, 1
    %p96 = scmp.ne.s32.totalorder %s91, %s93
    %p97 = scmp.eq.s32.totalorder %s15, 0
    %p98 = por %p96, %p97
    %p99 = scmp.ne.s32.totalorder %s91, %s93
    %p100 = scmp.eq.s32.totalorder %s20, 1
    %p101 = por %p99, %p100
    %p102 = scmp.ne.s32.totalorder %s93, %s94
    %p103 = scmp.eq.s32.totalorder %s20, 0
    %p104 = por %p102, %p103
    %p105 = scmp.ne.s32.totalorder %s93, %s94
    %p106 = scmp.eq.s32.totalorder %s21, 1
    %p107 = por %p105, %p106
    %p109 = scmp.ne.s32.totalorder %s94, %s108
    %p110 = scmp.eq.s32.totalorder %s21, 0
    %p111 = por %p109, %p110
    %s113 = sadd.s32 %s112, 1
    %p116 = scmp.eq.s32.totalorder %s15, 1
    %p117 = scmp.ne.s32.totalorder %s112, %s114
    %p118 = scmp.eq.s32.totalorder %s15, 0
    %p119 = por %p117, %p118
    %p120 = scmp.ne.s32.totalorder %s112, %s114
    %p121 = scmp.eq.s32.totalorder %s20, 1
    %p122 = por %p120, %p121
    %p123 = scmp.ne.s32.totalorder %s114, %s115
    %p124 = scmp.eq.s32.totalorder %s20, 0
    %p125 = por %p123, %p124
    %p126 = scmp.ne.s32.totalorder %s114, %s115
    %p127 = scmp.eq.s32.totalorder %s21, 1
    %p128 = por %p126, %p127
    %p130 = scmp.ne.s32.totalorder %s115, %s129
    %p131 = scmp.eq.s32.totalorder %s21, 0
    %p132 = por %p130, %p131
    %s134 = sadd.s32 %s133, 1
    %p137 = scmp.eq.s32.totalorder %s15, 1
    %p138 = scmp.ne.s32.totalorder %s133, %s135
    %p139 = scmp.eq.s32.totalorder %s15, 0
    %p140 = por %p138, %p139
    %p141 = scmp.ne.s32.totalorder %s133, %s135
    %p142 = scmp.eq.s32.totalorder %s20, 1
    %p143 = por %p141, %p142
    %p144 = scmp.ne.s32.totalorder %s135, %s136
    %p145 = scmp.eq.s32.totalorder %s20, 0
    %p146 = por %p144, %p145
    %p147 = scmp.ne.s32.totalorder %s135, %s136
    %p148 = scmp.eq.s32.totalorder %s21, 1
    %p149 = por %p147, %p148
    %p151 = scmp.ne.s32.totalorder %s136, %s150
    %p152 = scmp.eq.s32.totalorder %s21, 0
    %p153 = por %p151, %p152
    %s155 = sadd.s32 %s154, 1
    %p158 = scmp.eq.s32.totalorder %s15, 1
    %p159 = scmp.ne.s32.totalorder %s154, %s156
    %p160 = scmp.eq.s32.totalorder %s15, 0
    %p161 = por %p159, %p160
    %p162 = scmp.ne.s32.totalorder %s154, %s156
    %p163 = scmp.eq.s32.totalorder %s20, 1
    %p164 = por %p162, %p163
    %p165 = scmp.ne.s32.totalorder %s156, %s157
    %p166 = scmp.eq.s32.totalorder %s20, 0
    %p167 = por %p165, %p166
    %p168 = scmp.ne.s32.totalorder %s156, %s157
    %p169 = scmp.eq.s32.totalorder %s21, 1
    %p170 = por %p168, %p169
    %p172 = scmp.ne.s32.totalorder %s157, %s171
    %p173 = scmp.eq.s32.totalorder %s21, 0
    %p174 = por %p172, %p173
    %s176 = sadd.s32 %s175, 1
    %p179 = scmp.eq.s32.totalorder %s15, 1
    %p180 = scmp.ne.s32.totalorder %s175, %s177
    %p181 = scmp.eq.s32.totalorder %s15, 0
    %p182 = por %p180, %p181
    %p183 = scmp.ne.s32.totalorder %s175, %s177
    %p184 = scmp.eq.s32.totalorder %s20, 1
    %p185 = por %p183, %p184
    %p186 = scmp.ne.s32.totalorder %s177, %s178
    %p187 = scmp.eq.s32.totalorder %s20, 0
    %p188 = por %p186, %p187
    %p189 = scmp.ne.s32.totalorder %s177, %s178
    %p190 = scmp.eq.s32.totalorder %s21, 1
    %p191 = por %p189, %p190
    %p193 = scmp.ne.s32.totalorder %s178, %s192
    %p194 = scmp.eq.s32.totalorder %s21, 0
    %p195 = por %p193, %p194
    %s197 = sadd.s32 %s196, 1
    %p200 = scmp.eq.s32.totalorder %s15, 1
    %p201 = scmp.ne.s32.totalorder %s196, %s198
    %p202 = scmp.eq.s32.totalorder %s15, 0
    %p203 = por %p201, %p202
    %p204 = scmp.ne.s32.totalorder %s196, %s198
    %p205 = scmp.eq.s32.totalorder %s20, 1
    %p206 = por %p204, %p205
    %p207 = scmp.ne.s32.totalorder %s198, %s199
    %p208 = scmp.eq.s32.totalorder %s20, 0
    %p209 = por %p207, %p208
    %p210 = scmp.ne.s32.totalorder %s198, %s199
    %p211 = scmp.eq.s32.totalorder %s21, 1
    %p212 = por %p210, %p211
    %p214 = scmp.ne.s32.totalorder %s199, %s213
    %p215 = scmp.eq.s32.totalorder %s21, 0
    %p216 = por %p214, %p215
    %s217 = ssub.s32 %s15, %s22
    %p218 = scmp.eq.s32.totalorder %s217, 0
    %s220 = sadd.s32 %s219, 1
    %s221 = scalar_select %p218, %s219, %s220
    %p224 = pneg %p218
    %p225 = scmp.eq.s32.totalorder %s15, 1
    %p226 = por %p224, %p225
    %p227 = scmp.ne.s32.totalorder %s219, %s222
    %p228 = scmp.eq.s32.totalorder %s15, 0
    %p229 = por %p227, %p228
    %p230 = scmp.ne.s32.totalorder %s219, %s222
    %p231 = scmp.eq.s32.totalorder %s20, 1
    %p232 = por %p230, %p231
    %p233 = scmp.ne.s32.totalorder %s222, %s223
    %p234 = scmp.eq.s32.totalorder %s20, 0
    %p235 = por %p233, %p234
    %p236 = scmp.ne.s32.totalorder %s222, %s223
    %p237 = scmp.eq.s32.totalorder %s21, 1
    %p238 = por %p236, %p237
    %p240 = scmp.ne.s32.totalorder %s223, %s239
    %p241 = scmp.eq.s32.totalorder %s21, 0
    %p242 = por %p240, %p241
    %p243 = scmp.le.s32.totalorder 1, %s15
    %p244 = scmp.lt.s32.totalorder %s15, 3
    %p245 = pnand %p243, %p244
    %p246 = pneg %p245
    // Predicated region
    $region9: #{clip_caption_forward.1} parent=5 // pred_check
      _
    $region10: #{clip_caption_forward.1} parent=5 // pred_check_branch
      %248 = sbr.rel (%p245) target = $region12
    $region11: #{clip_caption_forward.1} parent=5 // pred_region
      %s249 = ssub.s32 %s15, 1
      // Predicated region
      $region13: #{clip_caption_forward.1} parent=11 // pred_check
        %p250 = pneg %p62
      $region14: #{clip_caption_forward.1} parent=11 // pred_check_branch
        %252 = sbr.rel (%p250) target = $region16
      $region15: #{clip_caption_forward.1} parent=11 // pred_region
        _
      $region16: #{clip_caption_forward.1} parent=11 // pred_fallthru
        _
      // Predicated region
      $region17: #{clip_caption_forward.1} parent=11 // pred_check
        %p253 = pneg %p83
      $region18: #{clip_caption_forward.1} parent=11 // pred_check_branch
        %255 = sbr.rel (%p253) target = $region20
      $region19: #{clip_caption_forward.1} parent=11 // pred_region
        _
      $region20: #{clip_caption_forward.1} parent=11 // pred_fallthru
        _
      // Predicated region
      $region21: #{clip_caption_forward.1} parent=11 // pred_check
        %p256 = pneg %p104
      $region22: #{clip_caption_forward.1} parent=11 // pred_check_branch
        %258 = sbr.rel (%p256) target = $region24
      $region23: #{clip_caption_forward.1} parent=11 // pred_region
        _
      $region24: #{clip_caption_forward.1} parent=11 // pred_fallthru
        _
      // Predicated region
      $region25: #{clip_caption_forward.1} parent=11 // pred_check
        %p259 = pneg %p125
      $region26: #{clip_caption_forward.1} parent=11 // pred_check_branch
        %261 = sbr.rel (%p259) target = $region28
      $region27: #{clip_caption_forward.1} parent=11 // pred_region
        _
      $region28: #{clip_caption_forward.1} parent=11 // pred_fallthru
        _
      // Predicated region
      $region29: #{clip_caption_forward.1} parent=11 // pred_check
        %p262 = pneg %p146
      $region30: #{clip_caption_forward.1} parent=11 // pred_check_branch
        %264 = sbr.rel (%p262) target = $region32
      $region31: #{clip_caption_forward.1} parent=11 // pred_region
        _
      $region32: #{clip_caption_forward.1} parent=11 // pred_fallthru
        _
      // Predicated region
      $region33: #{clip_caption_forward.1} parent=11 // pred_check
        %p265 = pneg %p167
      $region34: #{clip_caption_forward.1} parent=11 // pred_check_branch
        %267 = sbr.rel (%p265) target = $region36
      $region35: #{clip_caption_forward.1} parent=11 // pred_region
        _
      $region36: #{clip_caption_forward.1} parent=11 // pred_fallthru
        _
      // Predicated region
      $region37: #{clip_caption_forward.1} parent=11 // pred_check
        %p268 = pneg %p188
      $region38: #{clip_caption_forward.1} parent=11 // pred_check_branch
        %270 = sbr.rel (%p268) target = $region40
      $region39: #{clip_caption_forward.1} parent=11 // pred_region
        _
      $region40: #{clip_caption_forward.1} parent=11 // pred_fallthru
        _
      // Predicated region
      $region41: #{clip_caption_forward.1} parent=11 // pred_check
        %p271 = pneg %p209
      $region42: #{clip_caption_forward.1} parent=11 // pred_check_branch
        %273 = sbr.rel (%p271) target = $region44
      $region43: #{clip_caption_forward.1} parent=11 // pred_region
        _
      $region44: #{clip_caption_forward.1} parent=11 // pred_fallthru
        _
    $region12: #{clip_caption_forward.1} parent=5 // pred_fallthru
      _
    %p274 = scmp.lt.s32.totalorder %s15, 2
    // Predicated region
    $region45: #{clip_caption_forward.1} parent=5 // pred_check
      %p275 = pneg %p274
    $region46: #{clip_caption_forward.1} parent=5 // pred_check_branch
      %277 = sbr.rel (%p275) target = $region48
    $region47: #{clip_caption_forward.1} parent=5 // pred_region
      // Predicated region
      $region49: #{clip_caption_forward.1} parent=47 // pred_check
        %p278 = pneg %p35
      $region50: #{clip_caption_forward.1} parent=47 // pred_check_branch
        %280 = sbr.rel (%p278) target = $region52
      $region51: #{clip_caption_forward.1} parent=47 // pred_region
        %p281 = scmp.lt.s32.totalorder %s15, 1
        %s282 = scalar_select %p281, %s15, 1
        %s283 = smul.addr %s282, 2
        %s284 = smul.addr %s283, 8
        %s285 = scalar_lea.vmem %s0, %s284
      $region52: #{clip_caption_forward.1} parent=47 // pred_fallthru
        _
    $region48: #{clip_caption_forward.1} parent=5 // pred_fallthru
      _
    %p286 = scmp.le.s32.totalorder 1, %s15
    %p287 = scmp.lt.s32.totalorder %s15, 3
    %p288 = pnand %p286, %p287
    %p289 = pneg %p288
    // Predicated region
    $region53: #{clip_caption_forward.1} parent=5 // pred_check
      _
    $region54: #{clip_caption_forward.1} parent=5 // pred_check_branch
      %291 = sbr.rel (%p288) target = $region56
    $region55: #{clip_caption_forward.1} parent=5 // pred_region
      %s292 = ssub.s32 %s15, 1
      %p293 = scmp.lt.s32.totalorder %s20, 1
      %s294 = scalar_select %p293, %s20, 1
      %s295 = smul.addr %s294, 2
      %s296 = smul.addr %s295, 8
      %s297 = scalar_lea.vmem %s0, %s296
      %p298 = pneg %p41
      %p299 = pneg %p38
      %p300 = pneg %p62
      %p301 = pneg %p59
      %p302 = pneg %p83
      %p303 = pneg %p80
      %p304 = pneg %p104
      %p305 = pneg %p101
      %p306 = pneg %p125
      %p307 = pneg %p122
      %p308 = pneg %p146
      %p309 = pneg %p143
      %p310 = pneg %p167
      %p311 = pneg %p164
      %p312 = pneg %p188
      %p313 = pneg %p185
      %p314 = pneg %p209
      %p315 = pneg %p206
      %p316 = pneg %p235
      %p317 = pneg %p232
      %p318 = scmp.lt.s32.totalorder %s20, 1
      %s319 = scalar_select %p318, %s20, 1
      %s320 = smul.addr %s319, 2
      %s321 = smul.addr %s320, 8
      %s322 = scalar_lea.vmem %s9, %s321
      %p323 = scmp.lt.s32.totalorder %s20, 1
      %s324 = scalar_select %p323, %s20, 1
      %s325 = smul.addr %s324, 2
      %s326 = smul.addr %s325, 8
      %s327 = scalar_lea.vmem %s0, %s326
      %p328 = scmp.lt.s32.totalorder %s20, 1
      %s329 = scalar_select %p328, %s20, 1
      %s330 = smul.addr %s329, 2
      %s331 = smul.addr %s330, 8
      %s332 = scalar_lea.vmem %s9, %s331
      %v334 = vld [vmem:[%s327] sm:$0xff]
      %v335 = vld [vmem:[%s327 + $0x8] sm:$0xff]
      %v336 = vld [vmem:[%s1] sm:$0xff]
      %v337 = vld [vmem:[%s1 + $0x8] sm:$0xff]
      %v338 = vld [vmem:[%s6] sm:$0xff]
      %vm339 = vcmask 261120
      %v340 = vsel %vm339, %v334, 0.0
      %341 = vadd.xlane.f32.xlu0 %v340
      %v342 = vpop.xlane.xlu0 %341
      %v343 = vsel %vm339, %v335, 0.0
      %344 = vadd.xlane.f32.xlu0 %v343
      %v345 = vpop.xlane.xlu0 %344
      %v346 = vrcp.pop 32.0
      %v347 = vmul.f32 32.0, %v346
      %v348 = vsub.f32 1.0, %v347
      %v349 = vmul.f32 %v346, %v348
      %v350 = vadd.f32 %v346, %v349
      %vm351 = vweird.f32 %v346
      %v352 = vsel %vm351, %v346, %v350
      %v353 = vmul.f32 %v342, %v352
      %v354 = vmul.f32 %v345, %v352
      %v355 = vsub.f32 %v334, %v353
      %v356 = vsub.f32 %v335, %v354
      %v357 = vmul.f32 %v355, %v355
      %v358 = vmul.f32 %v356, %v356
      %v359 = vsel %vm339, %v357, 0.0
      %360 = vadd.xlane.f32.xlu0 %v359
      %v361 = vpop.xlane.xlu0 %360
      %v362 = vsel %vm339, %v358, 0.0
      %363 = vadd.xlane.f32.xlu0 %v362
      %v364 = vpop.xlane.xlu0 %363
      %v365 = vmul.f32 %v361, %v352
      %v366 = vmul.f32 %v364, %v352
      %v367 = vadd.f32 %v365, 1e-05
      %v368 = vadd.f32 %v366, 1e-05
      %v369 = vrsqrt.pop %v367
      %v370 = vmul.f32 %v369, %v367
      %v371 = vmul.f32 %v370, %v369
      %v372 = vmul.f32 0.5, %v371
      %v373 = vsub.f32 1.5, %v372
      %v374 = vmul.f32 %v369, %v373
      %vm375 = vweird.f32 %v367
      %vm376 = vweird.f32 %v369
      %vm377 = vmor %vm375, %vm376
      %v378 = vsel %vm377, %v369, %v374
      %v379 = vrsqrt.pop %v368
      %v380 = vmul.f32 %v379, %v368
      %v381 = vmul.f32 %v380, %v379
      %v382 = vmul.f32 0.5, %v381
      %v383 = vsub.f32 1.5, %v382
      %v384 = vmul.f32 %v379, %v383
      %vm385 = vweird.f32 %v368
      %vm386 = vweird.f32 %v379
      %vm387 = vmor %vm385, %vm386
      %v388 = vsel %vm387, %v379, %v384
      %v389 = vmul.f32 %v355, %v378
      %v390 = vmul.f32 %v356, %v388
      %v391 = vperm.slane %v338, 0
      %v392 = vmul.f32 %v389, %v391
      %v393 = vmul.f32 %v390, %v391
      %v394 = vperm.slane %v338, 1
      %v395 = vadd.f32 %v392, %v394
      %v396 = vadd.f32 %v393, %v394
      %v397 = vpack.c.bf16 %v396, %v395
      %v398 = vld [vmem:[%s2] sm:$0xf]
      %v399 = vld [vmem:[%s2 + $0x4] sm:$0xf]
      %v400 = vld [vmem:[%s2 + $0x8] sm:$0xf]
      %v401 = vld [vmem:[%s2 + $0xc] sm:$0xf]
      %v402 = vperm.slane %v338, 2
      %v407 = vunpack.c.l.b16 %v398
      %v408 = vunpack.c.l.b16 %v399
      %v409 = vunpack.c.l.b16 %v400
      %v410 = vunpack.c.l.b16 %v401
      %v411 = vpack.c.b16 %v408, %v407
      %v412 = vpack.c.b16 %v410, %v409
      %v416 = vsel %vm339, %v397, 0
      %418 = vmatpush.bf16.msra.mxu0 0
      %419 = vmatpush.bf16.msra.mxu0 0
      %420 = vmatpush.bf16.msra.mxu0 0
      %421 = vmatpush.bf16.msra.mxu0 0
      %422 = vmatpush.bf16.msra.mxu0 0
      %423 = vmatpush.bf16.msra.mxu0 0
      %424 = vmatpush.bf16.msra.mxu0 %v412
      %425 = vmatpush.bf16.msra.mxu0 %v411
      %426 = vmatmul.bf16.gmra.mxu0 %v416
      %v427 = vpop.f32.mrf.mxu0
      %v428 = vadd.f32 %v402, %v427
      %v429 = vpop.f32.mrf.mxu0
      %v430 = vadd.f32 %v402, %v429
      %431 = vdwg.mxu0
      %v432 = vpack.c.bf16 %v428, %v428
      %v433 = vpack.c.bf16 %v430, %v430
      %v436 = vunpack.c.l.b16 %v432
      %v437 = vunpack.c.l.b16 %v433
      %v438 = vpack.c.b16 %v437, %v436
      %439 = vrot.lane.b32.xlu0 %v438, 96
      %v440 = vpop.permute.xlu0 %439
      %vm441 = vcmask 64512
      %v443 = vsel %vm441, %v438, 0
      %v446 = vsel %vm441, %v440, 0
      %448 = vmatpush.bf16.xpose.msra.mxu0 0
      %449 = vmatpush.bf16.xpose.msra.mxu0 0
      %450 = vmatpush.bf16.xpose.msra.mxu0 0
      %451 = vmatpush.bf16.xpose.msra.mxu0 0
      %452 = vmatpush.bf16.xpose.msra.mxu0 0
      %453 = vmatpush.bf16.xpose.msra.mxu0 0
      %454 = vmatpush.bf16.xpose.msra.mxu0 0
      %455 = vmatpush.bf16.xpose.msra.mxu0 %v446
      %456 = vmatmul.bf16.gmra.mxu0 %v443
      %v457 = vpop.f32.mrf.mxu0
      %v458 = vadd.f32 %v336, %v457
      %v459 = vpop.f32.mrf.mxu0
      %v460 = vadd.f32 %v337, %v459
      %461 = vdwg.mxu0
      %vm462 = vcmask 130048
      %v463 = vsel %vm462, %v458, -inf
      %464 = vmax.xlane.f32.xlu0 %v463
      %v465 = vpop.xlane.xlu0 %464
      %v466 = vsel %vm462, %v460, -inf
      %467 = vmax.xlane.f32.xlu0 %v466
      %v468 = vpop.xlane.xlu0 %467
      %v469 = vsub.f32 %v458, %v465
      %v470 = vsub.f32 %v460, %v468
      %v471 = vmul.f32 %v469, 1.442695
      %v472 = vpow.pop %v471
      %v473 = vmul.f32 %v470, 1.442695
      %v474 = vpow.pop %v473
      %v475 = vsel %vm462, %v472, 0.0
      %476 = vadd.xlane.f32.xlu0 %v475
      %v477 = vpop.xlane.xlu0 %476
      %v478 = vsel %vm462, %v474, 0.0
      %479 = vadd.xlane.f32.xlu0 %v478
      %v480 = vpop.xlane.xlu0 %479
      %v481 = vrcp.pop %v477
      %v482 = vrcp.pop %v480
      %v483 = vmul.f32 %v472, %v481
      %v484 = vmul.f32 %v474, %v482
      %v485 = vpack.c.bf16 %v484, %v483
      %486 = vrot.lane.b32.xlu0 %v438, 64
      %v487 = vpop.permute.xlu0 %486
      %v490 = vsel %vm462, %v485, 0
      %492 = vmatpush.bf16.msra.mxu0 0
      %493 = vmatpush.bf16.msra.mxu0 0
      %494 = vmatpush.bf16.msra.mxu0 0
      %495 = vmatpush.bf16.msra.mxu0 0
      %496 = vmatpush.bf16.msra.mxu0 0
      %497 = vmatpush.bf16.msra.mxu0 0
      %498 = vmatpush.bf16.msra.mxu0 0
      %499 = vmatpush.bf16.msra.mxu0 %v487
      %500 = vmatmul.bf16.gmra.mxu0 %v490
      %v501 = vpop.f32.mrf.mxu0
      %v502 = vadd.f32 0.0, %v501
      %v503 = vpop.f32.mrf.mxu0
      %v504 = vadd.f32 0.0, %v503
      %505 = vdwg.mxu0
      %506 = vrot.lane.b32.xlu0 %v438, 120
      %v507 = vpop.permute.xlu0 %506
      %508 = vrot.lane.b32.xlu0 %v438, 88
      %v509 = vpop.permute.xlu0 %508
      %v511 = vsel %vm441, %v507, 0
      %v514 = vsel %vm441, %v509, 0
      %516 = vmatpush.bf16.xpose.msra.mxu0 0
      %517 = vmatpush.bf16.xpose.msra.mxu0 0
      %518 = vmatpush.bf16.xpose.msra.mxu0 0
      %519 = vmatpush.bf16.xpose.msra.mxu0 0
      %520 = vmatpush.bf16.xpose.msra.mxu0 0
      %521 = vmatpush.bf16.xpose.msra.mxu0 0
      %522 = vmatpush.bf16.xpose.msra.mxu0 0
      %523 = vmatpush.bf16.xpose.msra.mxu0 %v514
      %524 = vmatmul.bf16.gmra.mxu0 %v511
      %v525 = vpop.f32.mrf.mxu0
      %v526 = vadd.f32 %v336, %v525
      %v527 = vpop.f32.mrf.mxu0
      %v528 = vadd.f32 %v337, %v527
      %529 = vdwg.mxu0
      %v530 = vsel %vm462, %v526, -inf
      %531 = vmax.xlane.f32.xlu0 %v530
      %v532 = vpop.xlane.xlu0 %531
      %v533 = vsel %vm462, %v528, -inf
      %534 = vmax.xlane.f32.xlu0 %v533
      %v535 = vpop.xlane.xlu0 %534
      %v536 = vsub.f32 %v526, %v532
      %v537 = vsub.f32 %v528, %v535
      %v538 = vmul.f32 %v536, 1.442695
      %v539 = vpow.pop %v538
      %v540 = vmul.f32 %v537, 1.442695
      %v541 = vpow.pop %v540
      %v542 = vsel %vm462, %v539, 0.0
      %543 = vadd.xlane.f32.xlu0 %v542
      %v544 = vpop.xlane.xlu0 %543
      %v545 = vsel %vm462, %v541, 0.0
      %546 = vadd.xlane.f32.xlu0 %v545
      %v547 = vpop.xlane.xlu0 %546
      %v548 = vrcp.pop %v544
      %v549 = vrcp.pop %v547
      %v550 = vmul.f32 %v539, %v548
      %v551 = vmul.f32 %v541, %v549
      %v552 = vpack.c.bf16 %v551, %v550
      %553 = vrot.lane.b32.xlu0 %v438, 56
      %v554 = vpop.permute.xlu0 %553
      %v557 = vsel %vm462, %v552, 0
      %559 = vmatpush.bf16.msra.mxu0 0
      %560 = vmatpush.bf16.msra.mxu0 0
      %561 = vmatpush.bf16.msra.mxu0 0
      %562 = vmatpush.bf16.msra.mxu0 0
      %563 = vmatpush.bf16.msra.mxu0 0
      %564 = vmatpush.bf16.msra.mxu0 0
      %565 = vmatpush.bf16.msra.mxu0 0
      %566 = vmatpush.bf16.msra.mxu0 %v554
      %567 = vmatmul.bf16.gmra.mxu0 %v557
      %v568 = vpop.f32.mrf.mxu0
      %v569 = vadd.f32 0.0, %v568
      %v570 = vpop.f32.mrf.mxu0
      %v571 = vadd.f32 0.0, %v570
      %572 = vdwg.mxu0
      %573 = vrot.lane.b32.xlu0 %v438, 112
      %v574 = vpop.permute.xlu0 %573
      %575 = vrot.lane.b32.xlu0 %v438, 80
      %v576 = vpop.permute.xlu0 %575
      %v578 = vsel %vm441, %v574, 0
      %v581 = vsel %vm441, %v576, 0
      %583 = vmatpush.bf16.xpose.msra.mxu0 0
      %584 = vmatpush.bf16.xpose.msra.mxu0 0
      %585 = vmatpush.bf16.xpose.msra.mxu0 0
      %586 = vmatpush.bf16.xpose.msra.mxu0 0
      %587 = vmatpush.bf16.xpose.msra.mxu0 0
      %588 = vmatpush.bf16.xpose.msra.mxu0 0
      %589 = vmatpush.bf16.xpose.msra.mxu0 0
      %590 = vmatpush.bf16.xpose.msra.mxu0 %v581
      %591 = vmatmul.bf16.gmra.mxu0 %v578
      %v592 = vpop.f32.mrf.mxu0
      %v593 = vadd.f32 %v336, %v592
      %v594 = vpop.f32.mrf.mxu0
      %v595 = vadd.f32 %v337, %v594
      %596 = vdwg.mxu0
      %v597 = vsel %vm462, %v593, -inf
      %598 = vmax.xlane.f32.xlu0 %v597
      %v599 = vpop.xlane.xlu0 %598
      %v600 = vsel %vm462, %v595, -inf
      %601 = vmax.xlane.f32.xlu0 %v600
      %v602 = vpop.xlane.xlu0 %601
      %v603 = vsub.f32 %v593, %v599
      %v604 = vsub.f32 %v595, %v602
      %v605 = vmul.f32 %v603, 1.442695
      %v606 = vpow.pop %v605
      %v607 = vmul.f32 %v604, 1.442695
      %v608 = vpow.pop %v607
      %v609 = vsel %vm462, %v606, 0.0
      %610 = vadd.xlane.f32.xlu0 %v609
      %v611 = vpop.xlane.xlu0 %610
      %v612 = vsel %vm462, %v608, 0.0
      %613 = vadd.xlane.f32.xlu0 %v612
      %v614 = vpop.xlane.xlu0 %613
      %v615 = vrcp.pop %v611
      %v616 = vrcp.pop %v614
      %v617 = vmul.f32 %v606, %v615
      %v618 = vmul.f32 %v608, %v616
      %v619 = vpack.c.bf16 %v618, %v617
      %620 = vrot.lane.b32.xlu0 %v438, 48
      %v621 = vpop.permute.xlu0 %620
      %v624 = vsel %vm462, %v619, 0
      %626 = vmatpush.bf16.msra.mxu0 0
      %627 = vmatpush.bf16.msra.mxu0 0
      %628 = vmatpush.bf16.msra.mxu0 0
      %629 = vmatpush.bf16.msra.mxu0 0
      %630 = vmatpush.bf16.msra.mxu0 0
      %631 = vmatpush.bf16.msra.mxu0 0
      %632 = vmatpush.bf16.msra.mxu0 0
      %633 = vmatpush.bf16.msra.mxu0 %v621
      %634 = vmatmul.bf16.gmra.mxu0 %v624
      %v635 = vpop.f32.mrf.mxu0
      %v636 = vadd.f32 0.0, %v635
      %v637 = vpop.f32.mrf.mxu0
      %v638 = vadd.f32 0.0, %v637
      %639 = vdwg.mxu0
      %640 = vrot.lane.b32.xlu0 %v438, 104
      %v641 = vpop.permute.xlu0 %640
      %642 = vrot.lane.b32.xlu0 %v438, 72
      %v643 = vpop.permute.xlu0 %642
      %v645 = vsel %vm441, %v641, 0
      %v648 = vsel %vm441, %v643, 0
      %650 = vmatpush.bf16.xpose.msra.mxu0 0
      %651 = vmatpush.bf16.xpose.msra.mxu0 0
      %652 = vmatpush.bf16.xpose.msra.mxu0 0
      %653 = vmatpush.bf16.xpose.msra.mxu0 0
      %654 = vmatpush.bf16.xpose.msra.mxu0 0
      %655 = vmatpush.bf16.xpose.msra.mxu0 0
      %656 = vmatpush.bf16.xpose.msra.mxu0 0
      %657 = vmatpush.bf16.xpose.msra.mxu0 %v648
      %658 = vmatmul.bf16.gmra.mxu0 %v645
      %v659 = vpop.f32.mrf.mxu0
      %v660 = vadd.f32 %v336, %v659
      %v661 = vpop.f32.mrf.mxu0
      %v662 = vadd.f32 %v337, %v661
      %663 = vdwg.mxu0
      %v664 = vsel %vm462, %v660, -inf
      %665 = vmax.xlane.f32.xlu0 %v664
      %v666 = vpop.xlane.xlu0 %665
      %v667 = vsel %vm462, %v662, -inf
      %668 = vmax.xlane.f32.xlu0 %v667
      %v669 = vpop.xlane.xlu0 %668
      %v670 = vsub.f32 %v660, %v666
      %v671 = vsub.f32 %v662, %v669
      %v672 = vmul.f32 %v670, 1.442695
      %v673 = vpow.pop %v672
      %v674 = vmul.f32 %v671, 1.442695
      %v675 = vpow.pop %v674
      %v676 = vsel %vm462, %v673, 0.0
      %677 = vadd.xlane.f32.xlu0 %v676
      %v678 = vpop.xlane.xlu0 %677
      %v679 = vsel %vm462, %v675, 0.0
      %680 = vadd.xlane.f32.xlu0 %v679
      %v681 = vpop.xlane.xlu0 %680
      %v682 = vrcp.pop %v678
      %v683 = vrcp.pop %v681
      %v684 = vmul.f32 %v673, %v682
      %v685 = vmul.f32 %v675, %v683
      %v686 = vpack.c.bf16 %v685, %v684
      %687 = vrot.lane.b32.xlu0 %v438, 40
      %v688 = vpop.permute.xlu0 %687
      %v691 = vsel %vm462, %v686, 0
      %693 = vmatpush.bf16.msra.mxu0 0
      %694 = vmatpush.bf16.msra.mxu0 0
      %695 = vmatpush.bf16.msra.mxu0 0
      %696 = vmatpush.bf16.msra.mxu0 0
      %697 = vmatpush.bf16.msra.mxu0 0
      %698 = vmatpush.bf16.msra.mxu0 0
      %699 = vmatpush.bf16.msra.mxu0 0
      %700 = vmatpush.bf16.msra.mxu0 %v688
      %701 = vmatmul.bf16.gmra.mxu0 %v691
      %v702 = vpop.f32.mrf.mxu0
      %v703 = vadd.f32 0.0, %v702
      %v704 = vpop.f32.mrf.mxu0
      %v705 = vadd.f32 0.0, %v704
      %706 = vdwg.mxu0
      %709 = vrot.lane.b32.xlu0 %v569, 8
      %v710 = vpop.permute.xlu0 %709
      %711 = vrot.lane.b32.xlu0 %v571, 8
      %v712 = vpop.permute.xlu0 %711
      %717 = vrot.lane.b32.xlu0 %v636, 16
      %v718 = vpop.permute.xlu0 %717
      %719 = vrot.lane.b32.xlu0 %v638, 16
      %v720 = vpop.permute.xlu0 %719
      %725 = vrot.lane.b32.xlu0 %v703, 24
      %v726 = vpop.permute.xlu0 %725
      %727 = vrot.lane.b32.xlu0 %v705, 24
      %v728 = vpop.permute.xlu0 %727
      %v731 = vsel %vm441, %v502, %v710
      %v732 = vsel %vm441, %v504, %v712
      %v733 = vsel %vm462, %v731, %v718
      %v734 = vsel %vm462, %v732, %v720
      %vm735 = vcmask 195584
      %v736 = vsel %vm735, %v733, %v726
      %v737 = vsel %vm735, %v734, %v728
      %v738 = vpack.c.bf16 %v737, %v736
      %v739 = vld [vmem:[%s3] sm:$0xf]
      %v740 = vld [vmem:[%s3 + $0x4] sm:$0xf]
      %v741 = vld [vmem:[%s3 + $0x8] sm:$0xf]
      %v742 = vld [vmem:[%s3 + $0xc] sm:$0xf]
      %v747 = vunpack.c.l.b16 %v739
      %v748 = vunpack.c.l.b16 %v740
      %v749 = vunpack.c.l.b16 %v741
      %v750 = vunpack.c.l.b16 %v742
      %v751 = vpack.c.b16 %v748, %v747
      %v752 = vpack.c.b16 %v750, %v749
      %v756 = vsel %vm339, %v738, 0
      %758 = vmatpush.bf16.msra.mxu0 0
      %759 = vmatpush.bf16.msra.mxu0 0
      %760 = vmatpush.bf16.msra.mxu0 0
      %761 = vmatpush.bf16.msra.mxu0 0
      %762 = vmatpush.bf16.msra.mxu0 0
      %763 = vmatpush.bf16.msra.mxu0 0
      %764 = vmatpush.bf16.msra.mxu0 %v752
      %765 = vmatpush.bf16.msra.mxu0 %v751
      %766 = vmatmul.bf16.gmra.mxu0 %v756
      %v767 = vpop.f32.mrf.mxu0
      %v768 = vadd.f32 0.0, %v767
      %v769 = vpop.f32.mrf.mxu0
      %v770 = vadd.f32 0.0, %v769
      %771 = vdwg.mxu0
      %v772 = vadd.f32 %v334, %v768
      %v773 = vadd.f32 %v335, %v770
      %v774 = vperm.slane %v338, 3
      %v775 = vadd.f32 %v772, %v774
      %v776 = vadd.f32 %v773, %v774
      %v777 = vsel %vm339, %v775, 0.0
      %778 = vadd.xlane.f32.xlu0 %v777
      %v779 = vpop.xlane.xlu0 %778
      %v780 = vsel %vm339, %v776, 0.0
      %781 = vadd.xlane.f32.xlu0 %v780
      %v782 = vpop.xlane.xlu0 %781
      %v783 = vmul.f32 %v779, %v352
      %v784 = vmul.f32 %v782, %v352
      %v785 = vsub.f32 %v775, %v783
      %v786 = vsub.f32 %v776, %v784
      %v787 = vmul.f32 %v785, %v785
      %v788 = vmul.f32 %v786, %v786
      %v789 = vsel %vm339, %v787, 0.0
      %790 = vadd.xlane.f32.xlu0 %v789
      %v791 = vpop.xlane.xlu0 %790
      %v792 = vsel %vm339, %v788, 0.0
      %793 = vadd.xlane.f32.xlu0 %v792
      %v794 = vpop.xlane.xlu0 %793
      %v795 = vmul.f32 %v791, %v352
      %v796 = vmul.f32 %v794, %v352
      %v797 = vadd.f32 %v795, 1e-05
      %v798 = vadd.f32 %v796, 1e-05
      %v799 = vrsqrt.pop %v797
      %v800 = vmul.f32 %v799, %v797
      %v801 = vmul.f32 %v800, %v799
      %v802 = vmul.f32 0.5, %v801
      %v803 = vsub.f32 1.5, %v802
      %v804 = vmul.f32 %v799, %v803
      %vm805 = vweird.f32 %v797
      %vm806 = vweird.f32 %v799
      %vm807 = vmor %vm805, %vm806
      %v808 = vsel %vm807, %v799, %v804
      %v809 = vrsqrt.pop %v798
      %v810 = vmul.f32 %v809, %v798
      %v811 = vmul.f32 %v810, %v809
      %v812 = vmul.f32 0.5, %v811
      %v813 = vsub.f32 1.5, %v812
      %v814 = vmul.f32 %v809, %v813
      %vm815 = vweird.f32 %v798
      %vm816 = vweird.f32 %v809
      %vm817 = vmor %vm815, %vm816
      %v818 = vsel %vm817, %v809, %v814
      %v819 = vmul.f32 %v785, %v808
      %v820 = vmul.f32 %v786, %v818
      %v821 = vperm.slane %v338, 4
      %v822 = vmul.f32 %v819, %v821
      %v823 = vmul.f32 %v820, %v821
      %v824 = vperm.slane %v338, 5
      %v825 = vadd.f32 %v822, %v824
      %v826 = vadd.f32 %v823, %v824
      %v827 = vpack.c.bf16 %v826, %v825
      %v828 = vld [vmem:[%s4] sm:$0xf]
      %v829 = vld [vmem:[%s4 + $0x4] sm:$0xf]
      %v830 = vld [vmem:[%s4 + $0x8] sm:$0xf]
      %v831 = vld [vmem:[%s4 + $0xc] sm:$0xf]
      %v832 = vperm.slane %v338, 6
      %v837 = vunpack.c.l.b16 %v828
      %v838 = vunpack.c.l.b16 %v829
      %v839 = vunpack.c.l.b16 %v830
      %v840 = vunpack.c.l.b16 %v831
      %v841 = vpack.c.b16 %v838, %v837
      %v842 = vpack.c.b16 %v840, %v839
      %v846 = vsel %vm339, %v827, 0
      %848 = vmatpush.bf16.msra.mxu0 0
      %849 = vmatpush.bf16.msra.mxu0 0
      %850 = vmatpush.bf16.msra.mxu0 0
      %851 = vmatpush.bf16.msra.mxu0 0
      %852 = vmatpush.bf16.msra.mxu0 0
      %853 = vmatpush.bf16.msra.mxu0 0
      %854 = vmatpush.bf16.msra.mxu0 %v842
      %855 = vmatpush.bf16.msra.mxu0 %v841
      %856 = vmatmul.bf16.gmra.mxu0 %v846
      %v857 = vpop.f32.mrf.mxu0
      %v858 = vadd.f32 %v832, %v857
      %v859 = vpop.f32.mrf.mxu0
      %v860 = vadd.f32 %v832, %v859
      %861 = vdwg.mxu0
      %v862 = vmul.f32 %v858, 0.5
      %v863 = vmul.f32 %v860, 0.5
      %v864 = vmul.f32 %v858, 0.044715
      %v865 = vmul.f32 %v860, 0.044715
      %v866 = vmul.f32 %v864, %v858
      %v867 = vmul.f32 %v865, %v860
      %v868 = vmul.f32 %v866, %v858
      %v869 = vmul.f32 %v867, %v860
      %v870 = vadd.f32 %v858, %v868
      %v871 = vadd.f32 %v860, %v869
      %v872 = vmul.f32 %v870, 0.7978845
      %v873 = vmul.f32 %v871, 0.7978845
      %v874 = vtanh.pop %v872
      %v875 = vtanh.pop %v873
      %v876 = vadd.f32 %v874, 1.0
      %v877 = vadd.f32 %v875, 1.0
      %v878 = vmul.f32 %v862, %v876
      %v879 = vmul.f32 %v863, %v877
      %v880 = vpack.c.bf16 %v879, %v878
      %v881 = vld [vmem:[%s5] sm:$0xf]
      %v882 = vld [vmem:[%s5 + $0x4] sm:$0xf]
      %v883 = vld [vmem:[%s5 + $0x8] sm:$0xf]
      %v884 = vld [vmem:[%s5 + $0xc] sm:$0xf]
      %v885 = vld [vmem:[%s5 + $0x10] sm:$0xf]
      %v886 = vld [vmem:[%s5 + $0x14] sm:$0xf]
      %v887 = vld [vmem:[%s5 + $0x18] sm:$0xf]
      %v888 = vld [vmem:[%s5 + $0x1c] sm:$0xf]
      %v889 = vld [vmem:[%s5 + $0x20] sm:$0xf]
      %v890 = vld [vmem:[%s5 + $0x24] sm:$0xf]
      %v891 = vld [vmem:[%s5 + $0x28] sm:$0xf]
      %v892 = vld [vmem:[%s5 + $0x2c] sm:$0xf]
      %v893 = vld [vmem:[%s5 + $0x30] sm:$0xf]
      %v894 = vld [vmem:[%s5 + $0x34] sm:$0xf]
      %v895 = vld [vmem:[%s5 + $0x38] sm:$0xf]
      %v896 = vld [vmem:[%s5 + $0x3c] sm:$0xf]
      %v913 = vunpack.c.l.b16 %v881
      %v914 = vunpack.c.l.b16 %v882
      %v915 = vunpack.c.l.b16 %v883
      %v916 = vunpack.c.l.b16 %v884
      %v917 = vunpack.c.l.b16 %v885
      %v918 = vunpack.c.l.b16 %v886
      %v919 = vunpack.c.l.b16 %v887
      %v920 = vunpack.c.l.b16 %v888
      %v921 = vunpack.c.l.b16 %v889
      %v922 = vunpack.c.l.b16 %v890
      %v923 = vunpack.c.l.b16 %v891
      %v924 = vunpack.c.l.b16 %v892
      %v925 = vunpack.c.l.b16 %v893
      %v926 = vunpack.c.l.b16 %v894
      %v927 = vunpack.c.l.b16 %v895
      %v928 = vunpack.c.l.b16 %v896
      %v929 = vpack.c.b16 %v914, %v913
      %v930 = vpack.c.b16 %v916, %v915
      %v931 = vpack.c.b16 %v918, %v917
      %v932 = vpack.c.b16 %v920, %v919
      %v933 = vpack.c.b16 %v922, %v921
      %v934 = vpack.c.b16 %v924, %v923
      %v935 = vpack.c.b16 %v926, %v925
      %v936 = vpack.c.b16 %v928, %v927
      %945 = vmatpush.bf16.msra.mxu0 %v936
      %946 = vmatpush.bf16.msra.mxu0 %v935
      %947 = vmatpush.bf16.msra.mxu0 %v934
      %948 = vmatpush.bf16.msra.mxu0 %v933
      %949 = vmatpush.bf16.msra.mxu0 %v932
      %950 = vmatpush.bf16.msra.mxu0 %v931
      %951 = vmatpush.bf16.msra.mxu0 %v930
      %952 = vmatpush.bf16.msra.mxu0 %v929
      %953 = vmatmul.bf16.gmra.mxu0 %v880
      %v954 = vpop.f32.mrf.mxu0
      %v955 = vadd.f32 0.0, %v954
      %v956 = vpop.f32.mrf.mxu0
      %v957 = vadd.f32 0.0, %v956
      %958 = vdwg.mxu0
      %v959 = vadd.f32 %v775, %v955
      %v960 = vadd.f32 %v776, %v957
      %v961 = vperm.slane %v338, 7
      %v962 = vadd.f32 %v959, %v961
      %v963 = vadd.f32 %v960, %v961
      %s964 = scalar_lea.vmem %s6, 8
      %v965 = vld [vmem:[%s964] sm:$0xff]
      %v966 = vsel %vm339, %v962, 0.0
      %967 = vadd.xlane.f32.xlu0 %v966
      %v968 = vpop.xlane.xlu0 %967
      %v969 = vsel %vm339, %v963, 0.0
      %970 = vadd.xlane.f32.xlu0 %v969
      %v971 = vpop.xlane.xlu0 %970
      %v972 = vmul.f32 %v968, %v352
      %v973 = vmul.f32 %v971, %v352
      %v974 = vsub.f32 %v962, %v972
      %v975 = vsub.f32 %v963, %v973
      %v976 = vmul.f32 %v974, %v974
      %v977 = vmul.f32 %v975, %v975
      %v978 = vsel %vm339, %v976, 0.0
      %979 = vadd.xlane.f32.xlu0 %v978
      %v980 = vpop.xlane.xlu0 %979
      %v981 = vsel %vm339, %v977, 0.0
      %982 = vadd.xlane.f32.xlu0 %v981
      %v983 = vpop.xlane.xlu0 %982
      %v984 = vmul.f32 %v980, %v352
      %v985 = vmul.f32 %v983, %v352
      %v986 = vadd.f32 %v984, 1e-05
      %v987 = vadd.f32 %v985, 1e-05
      %v988 = vrsqrt.pop %v986
      %v989 = vmul.f32 %v988, %v986
      %v990 = vmul.f32 %v989, %v988
      %v991 = vmul.f32 0.5, %v990
      %v992 = vsub.f32 1.5, %v991
      %v993 = vmul.f32 %v988, %v992
      %vm994 = vweird.f32 %v986
      %vm995 = vweird.f32 %v988
      %vm996 = vmor %vm994, %vm995
      %v997 = vsel %vm996, %v988, %v993
      %v998 = vrsqrt.pop %v987
      %v999 = vmul.f32 %v998, %v987
      %v1000 = vmul.f32 %v999, %v998
      %v1001 = vmul.f32 0.5, %v1000
      %v1002 = vsub.f32 1.5, %v1001
      %v1003 = vmul.f32 %v998, %v1002
      %vm1004 = vweird.f32 %v987
      %vm1005 = vweird.f32 %v998
      %vm1006 = vmor %vm1004, %vm1005
      %v1007 = vsel %vm1006, %v998, %v1003
      %v1008 = vmul.f32 %v974, %v997
      %v1009 = vmul.f32 %v975, %v1007
      %v1010 = vperm.slane %v965, 0
      %v1011 = vmul.f32 %v1008, %v1010
      %v1012 = vmul.f32 %v1009, %v1010
      %v1013 = vperm.slane %v965, 1
      %v1014 = vadd.f32 %v1011, %v1013
      %v1015 = vadd.f32 %v1012, %v1013
      %v1016 = vpack.c.bf16 %v1015, %v1014
      %s1017 = scalar_lea.vmem %s2, 16
      %v1018 = vld [vmem:[%s1017] sm:$0xf]
      %v1019 = vld [vmem:[%s1017 + $0x4] sm:$0xf]
      %v1020 = vld [vmem:[%s1017 + $0x8] sm:$0xf]
      %v1021 = vld [vmem:[%s1017 + $0xc] sm:$0xf]
      %v1022 = vperm.slane %v965, 2
      %v1027 = vunpack.c.l.b16 %v1018
      %v1028 = vunpack.c.l.b16 %v1019
      %v1029 = vunpack.c.l.b16 %v1020
      %v1030 = vunpack.c.l.b16 %v1021
      %v1031 = vpack.c.b16 %v1028, %v1027
      %v1032 = vpack.c.b16 %v1030, %v1029
      %v1036 = vsel %vm339, %v1016, 0
      %1038 = vmatpush.bf16.msra.mxu0 0
      %1039 = vmatpush.bf16.msra.mxu0 0
      %1040 = vmatpush.bf16.msra.mxu0 0
      %1041 = vmatpush.bf16.msra.mxu0 0
      %1042 = vmatpush.bf16.msra.mxu0 0
      %1043 = vmatpush.bf16.msra.mxu0 0
      %1044 = vmatpush.bf16.msra.mxu0 %v1032
      %1045 = vmatpush.bf16.msra.mxu0 %v1031
      %1046 = vmatmul.bf16.gmra.mxu0 %v1036
      %v1047 = vpop.f32.mrf.mxu0
      %v1048 = vadd.f32 %v1022, %v1047
      %v1049 = vpop.f32.mrf.mxu0
      %v1050 = vadd.f32 %v1022, %v1049
      %1051 = vdwg.mxu0
      %v1052 = vpack.c.bf16 %v1048, %v1048
      %v1053 = vpack.c.bf16 %v1050, %v1050
      %v1056 = vunpack.c.l.b16 %v1052
      %v1057 = vunpack.c.l.b16 %v1053
      %v1058 = vpack.c.b16 %v1057, %v1056
      %1059 = vrot.lane.b32.xlu0 %v1058, 96
      %v1060 = vpop.permute.xlu0 %1059
      %v1062 = vsel %vm441, %v1058, 0
      %v1065 = vsel %vm441, %v1060, 0
      %1067 = vmatpush.bf16.xpose.msra.mxu0 0
      %1068 = vmatpush.bf16.xpose.msra.mxu0 0
      %1069 = vmatpush.bf16.xpose.msra.mxu0 0
      %1070 = vmatpush.bf16.xpose.msra.mxu0 0
      %1071 = vmatpush.bf16.xpose.msra.mxu0 0
      %1072 = vmatpush.bf16.xpose.msra.mxu0 0
      %1073 = vmatpush.bf16.xpose.msra.mxu0 0
      %1074 = vmatpush.bf16.xpose.msra.mxu0 %v1065
      %1075 = vmatmul.bf16.gmra.mxu0 %v1062
      %v1076 = vpop.f32.mrf.mxu0
      %v1077 = vadd.f32 %v336, %v1076
      %v1078 = vpop.f32.mrf.mxu0
      %v1079 = vadd.f32 %v337, %v1078
      %1080 = vdwg.mxu0
      %v1081 = vsel %vm462, %v1077, -inf
      %1082 = vmax.xlane.f32.xlu0 %v1081
      %v1083 = vpop.xlane.xlu0 %1082
      %v1084 = vsel %vm462, %v1079, -inf
      %1085 = vmax.xlane.f32.xlu0 %v1084
      %v1086 = vpop.xlane.xlu0 %1085
      %v1087 = vsub.f32 %v1077, %v1083
      %v1088 = vsub.f32 %v1079, %v1086
      %v1089 = vmul.f32 %v1087, 1.442695
      %v1090 = vpow.pop %v1089
      %v1091 = vmul.f32 %v1088, 1.442695
      %v1092 = vpow.pop %v1091
      %v1093 = vsel %vm462, %v1090, 0.0
      %1094 = vadd.xlane.f32.xlu0 %v1093
      %v1095 = vpop.xlane.xlu0 %1094
      %v1096 = vsel %vm462, %v1092, 0.0
      %1097 = vadd.xlane.f32.xlu0 %v1096
      %v1098 = vpop.xlane.xlu0 %1097
      %v1099 = vrcp.pop %v1095
      %v1100 = vrcp.pop %v1098
      %v1101 = vmul.f32 %v1090, %v1099
      %v1102 = vmul.f32 %v1092, %v1100
      %v1103 = vpack.c.bf16 %v1102, %v1101
      %1104 = vrot.lane.b32.xlu0 %v1058, 64
      %v1105 = vpop.permute.xlu0 %1104
      %v1108 = vsel %vm462, %v1103, 0
      %1110 = vmatpush.bf16.msra.mxu0 0
      %1111 = vmatpush.bf16.msra.mxu0 0
      %1112 = vmatpush.bf16.msra.mxu0 0
      %1113 = vmatpush.bf16.msra.mxu0 0
      %1114 = vmatpush.bf16.msra.mxu0 0
      %1115 = vmatpush.bf16.msra.mxu0 0
      %1116 = vmatpush.bf16.msra.mxu0 0
      %1117 = vmatpush.bf16.msra.mxu0 %v1105
      %1118 = vmatmul.bf16.gmra.mxu0 %v1108
      %v1119 = vpop.f32.mrf.mxu0
      %v1120 = vadd.f32 0.0, %v1119
      %v1121 = vpop.f32.mrf.mxu0
      %v1122 = vadd.f32 0.0, %v1121
      %1123 = vdwg.mxu0
      %1124 = vrot.lane.b32.xlu0 %v1058, 120
      %v1125 = vpop.permute.xlu0 %1124
      %1126 = vrot.lane.b32.xlu0 %v1058, 88
      %v1127 = vpop.permute.xlu0 %1126
      %v1129 = vsel %vm441, %v1125, 0
      %v1132 = vsel %vm441, %v1127, 0
      %1134 = vmatpush.bf16.xpose.msra.mxu0 0
      %1135 = vmatpush.bf16.xpose.msra.mxu0 0
      %1136 = vmatpush.bf16.xpose.msra.mxu0 0
      %1137 = vmatpush.bf16.xpose.msra.mxu0 0
      %1138 = vmatpush.bf16.xpose.msra.mxu0 0
      %1139 = vmatpush.bf16.xpose.msra.mxu0 0
      %1140 = vmatpush.bf16.xpose.msra.mxu0 0
      %1141 = vmatpush.bf16.xpose.msra.mxu0 %v1132
      %1142 = vmatmul.bf16.gmra.mxu0 %v1129
      %v1143 = vpop.f32.mrf.mxu0
      %v1144 = vadd.f32 %v336, %v1143
      %v1145 = vpop.f32.mrf.mxu0
      %v1146 = vadd.f32 %v337, %v1145
      %1147 = vdwg.mxu0
      %v1148 = vsel %vm462, %v1144, -inf
      %1149 = vmax.xlane.f32.xlu0 %v1148
      %v1150 = vpop.xlane.xlu0 %1149
      %v1151 = vsel %vm462, %v1146, -inf
      %1152 = vmax.xlane.f32.xlu0 %v1151
      %v1153 = vpop.xlane.xlu0 %1152
      %v1154 = vsub.f32 %v1144, %v1150
      %v1155 = vsub.f32 %v1146, %v1153
      %v1156 = vmul.f32 %v1154, 1.442695
      %v1157 = vpow.pop %v1156
      %v1158 = vmul.f32 %v1155, 1.442695
      %v1159 = vpow.pop %v1158
      %v1160 = vsel %vm462, %v1157, 0.0
      %1161 = vadd.xlane.f32.xlu0 %v1160
      %v1162 = vpop.xlane.xlu0 %1161
      %v1163 = vsel %vm462, %v1159, 0.0
      %1164 = vadd.xlane.f32.xlu0 %v1163
      %v1165 = vpop.xlane.xlu0 %1164
      %v1166 = vrcp.pop %v1162
      %v1167 = vrcp.pop %v1165
      %v1168 = vmul.f32 %v1157, %v1166
      %v1169 = vmul.f32 %v1159, %v1167
      %v1170 = vpack.c.bf16 %v1169, %v1168
      %1171 = vrot.lane.b32.xlu0 %v1058, 56
      %v1172 = vpop.permute.xlu0 %1171
      %v1175 = vsel %vm462, %v1170, 0
      %1177 = vmatpush.bf16.msra.mxu0 0
      %1178 = vmatpush.bf16.msra.mxu0 0
      %1179 = vmatpush.bf16.msra.mxu0 0
      %1180 = vmatpush.bf16.msra.mxu0 0
      %1181 = vmatpush.bf16.msra.mxu0 0
      %1182 = vmatpush.bf16.msra.mxu0 0
      %1183 = vmatpush.bf16.msra.mxu0 0
      %1184 = vmatpush.bf16.msra.mxu0 %v1172
      %1185 = vmatmul.bf16.gmra.mxu0 %v1175
      %v1186 = vpop.f32.mrf.mxu0
      %v1187 = vadd.f32 0.0, %v1186
      %v1188 = vpop.f32.mrf.mxu0
      %v1189 = vadd.f32 0.0, %v1188
      %1190 = vdwg.mxu0
      %1191 = vrot.lane.b32.xlu0 %v1058, 112
      %v1192 = vpop.permute.xlu0 %1191
      %1193 = vrot.lane.b32.xlu0 %v1058, 80
      %v1194 = vpop.permute.xlu0 %1193
      %v1196 = vsel %vm441, %v1192, 0
      %v1199 = vsel %vm441, %v1194, 0
      %1201 = vmatpush.bf16.xpose.msra.mxu0 0
      %1202 = vmatpush.bf16.xpose.msra.mxu0 0
      %1203 = vmatpush.bf16.xpose.msra.mxu0 0
      %1204 = vmatpush.bf16.xpose.msra.mxu0 0
      %1205 = vmatpush.bf16.xpose.msra.mxu0 0
      %1206 = vmatpush.bf16.xpose.msra.mxu0 0
      %1207 = vmatpush.bf16.xpose.msra.mxu0 0
      %1208 = vmatpush.bf16.xpose.msra.mxu0 %v1199
      %1209 = vmatmul.bf16.gmra.mxu0 %v1196
      %v1210 = vpop.f32.mrf.mxu0
      %v1211 = vadd.f32 %v336, %v1210
      %v1212 = vpop.f32.mrf.mxu0
      %v1213 = vadd.f32 %v337, %v1212
      %1214 = vdwg.mxu0
      %v1215 = vsel %vm462, %v1211, -inf
      %1216 = vmax.xlane.f32.xlu0 %v1215
      %v1217 = vpop.xlane.xlu0 %1216
      %v1218 = vsel %vm462, %v1213, -inf
      %1219 = vmax.xlane.f32.xlu0 %v1218
      %v1220 = vpop.xlane.xlu0 %1219
      %v1221 = vsub.f32 %v1211, %v1217
      %v1222 = vsub.f32 %v1213, %v1220
      %v1223 = vmul.f32 %v1221, 1.442695
      %v1224 = vpow.pop %v1223
      %v1225 = vmul.f32 %v1222, 1.442695
      %v1226 = vpow.pop %v1225
      %v1227 = vsel %vm462, %v1224, 0.0
      %1228 = vadd.xlane.f32.xlu0 %v1227
      %v1229 = vpop.xlane.xlu0 %1228
      %v1230 = vsel %vm462, %v1226, 0.0
      %1231 = vadd.xlane.f32.xlu0 %v1230
      %v1232 = vpop.xlane.xlu0 %1231
      %v1233 = vrcp.pop %v1229
      %v1234 = vrcp.pop %v1232
      %v1235 = vmul.f32 %v1224, %v1233
      %v1236 = vmul.f32 %v1226, %v1234
      %v1237 = vpack.c.bf16 %v1236, %v1235
      %1238 = vrot.lane.b32.xlu0 %v1058, 48
      %v1239 = vpop.permute.xlu0 %1238
      %v1242 = vsel %vm462, %v1237, 0
      %1244 = vmatpush.bf16.msra.mxu0 0
      %1245 = vmatpush.bf16.msra.mxu0 0
      %1246 = vmatpush.bf16.msra.mxu0 0
      %1247 = vmatpush.bf16.msra.mxu0 0
      %1248 = vmatpush.bf16.msra.mxu0 0
      %1249 = vmatpush.bf16.msra.mxu0 0
      %1250 = vmatpush.bf16.msra.mxu0 0
      %1251 = vmatpush.bf16.msra.mxu0 %v1239
      %1252 = vmatmul.bf16.gmra.mxu0 %v1242
      %v1253 = vpop.f32.mrf.mxu0
      %v1254 = vadd.f32 0.0, %v1253
      %v1255 = vpop.f32.mrf.mxu0
      %v1256 = vadd.f32 0.0, %v1255
      %1257 = vdwg.mxu0
      %1258 = vrot.lane.b32.xlu0 %v1058, 104
      %v1259 = vpop.permute.xlu0 %1258
      %1260 = vrot.lane.b32.xlu0 %v1058, 72
      %v1261 = vpop.permute.xlu0 %1260
      %v1263 = vsel %vm441, %v1259, 0
      %v1266 = vsel %vm441, %v1261, 0
      %1268 = vmatpush.bf16.xpose.msra.mxu0 0
      %1269 = vmatpush.bf16.xpose.msra.mxu0 0
      %1270 = vmatpush.bf16.xpose.msra.mxu0 0
      %1271 = vmatpush.bf16.xpose.msra.mxu0 0
      %1272 = vmatpush.bf16.xpose.msra.mxu0 0
      %1273 = vmatpush.bf16.xpose.msra.mxu0 0
      %1274 = vmatpush.bf16.xpose.msra.mxu0 0
      %1275 = vmatpush.bf16.xpose.msra.mxu0 %v1266
      %1276 = vmatmul.bf16.gmra.mxu0 %v1263
      %v1277 = vpop.f32.mrf.mxu0
      %v1278 = vadd.f32 %v336, %v1277
      %v1279 = vpop.f32.mrf.mxu0
      %v1280 = vadd.f32 %v337, %v1279
      %1281 = vdwg.mxu0
      %v1282 = vsel %vm462, %v1278, -inf
      %1283 = vmax.xlane.f32.xlu0 %v1282
      %v1284 = vpop.xlane.xlu0 %1283
      %v1285 = vsel %vm462, %v1280, -inf
      %1286 = vmax.xlane.f32.xlu0 %v1285
      %v1287 = vpop.xlane.xlu0 %1286
      %v1288 = vsub.f32 %v1278, %v1284
      %v1289 = vsub.f32 %v1280, %v1287
      %v1290 = vmul.f32 %v1288, 1.442695
      %v1291 = vpow.pop %v1290
      %v1292 = vmul.f32 %v1289, 1.442695
      %v1293 = vpow.pop %v1292
      %v1294 = vsel %vm462, %v1291, 0.0
      %1295 = vadd.xlane.f32.xlu0 %v1294
      %v1296 = vpop.xlane.xlu0 %1295
      %v1297 = vsel %vm462, %v1293, 0.0
      %1298 = vadd.xlane.f32.xlu0 %v1297
      %v1299 = vpop.xlane.xlu0 %1298
      %v1300 = vrcp.pop %v1296
      %v1301 = vrcp.pop %v1299
      %v1302 = vmul.f32 %v1291, %v1300
      %v1303 = vmul.f32 %v1293, %v1301
      %v1304 = vpack.c.bf16 %v1303, %v1302
      %1305 = vrot.lane.b32.xlu0 %v1058, 40
      %v1306 = vpop.permute.xlu0 %1305
      %v1309 = vsel %vm462, %v1304, 0
      %1311 = vmatpush.bf16.msra.mxu0 0
      %1312 = vmatpush.bf16.msra.mxu0 0
      %1313 = vmatpush.bf16.msra.mxu0 0
      %1314 = vmatpush.bf16.msra.mxu0 0
      %1315 = vmatpush.bf16.msra.mxu0 0
      %1316 = vmatpush.bf16.msra.mxu0 0
      %1317 = vmatpush.bf16.msra.mxu0 0
      %1318 = vmatpush.bf16.msra.mxu0 %v1306
      %1319 = vmatmul.bf16.gmra.mxu0 %v1309
      %v1320 = vpop.f32.mrf.mxu0
      %v1321 = vadd.f32 0.0, %v1320
      %v1322 = vpop.f32.mrf.mxu0
      %v1323 = vadd.f32 0.0, %v1322
      %1324 = vdwg.mxu0
      %1327 = vrot.lane.b32.xlu0 %v1187, 8
      %v1328 = vpop.permute.xlu0 %1327
      %1329 = vrot.lane.b32.xlu0 %v1189, 8
      %v1330 = vpop.permute.xlu0 %1329
      %1335 = vrot.lane.b32.xlu0 %v1254, 16
      %v1336 = vpop.permute.xlu0 %1335
      %1337 = vrot.lane.b32.xlu0 %v1256, 16
      %v1338 = vpop.permute.xlu0 %1337
      %1343 = vrot.lane.b32.xlu0 %v1321, 24
      %v1344 = vpop.permute.xlu0 %1343
      %1345 = vrot.lane.b32.xlu0 %v1323, 24
      %v1346 = vpop.permute.xlu0 %1345
      %v1349 = vsel %vm441, %v1120, %v1328
      %v1350 = vsel %vm441, %v1122, %v1330
      %v1351 = vsel %vm462, %v1349, %v1336
      %v1352 = vsel %vm462, %v1350, %v1338
      %v1353 = vsel %vm735, %v1351, %v1344
      %v1354 = vsel %vm735, %v1352, %v1346
      %v1355 = vpack.c.bf16 %v1354, %v1353
      %s1356 = scalar_lea.vmem %s3, 16
      %v1357 = vld [vmem:[%s1356] sm:$0xf]
      %v1358 = vld [vmem:[%s1356 + $0x4] sm:$0xf]
      %v1359 = vld [vmem:[%s1356 + $0x8] sm:$0xf]
      %v1360 = vld [vmem:[%s1356 + $0xc] sm:$0xf]
      %v1365 = vunpack.c.l.b16 %v1357
      %v1366 = vunpack.c.l.b16 %v1358
      %v1367 = vunpack.c.l.b16 %v1359
      %v1368 = vunpack.c.l.b16 %v1360
      %v1369 = vpack.c.b16 %v1366, %v1365
      %v1370 = vpack.c.b16 %v1368, %v1367
      %v1374 = vsel %vm339, %v1355, 0
      %1376 = vmatpush.bf16.msra.mxu0 0
      %1377 = vmatpush.bf16.msra.mxu0 0
      %1378 = vmatpush.bf16.msra.mxu0 0
      %1379 = vmatpush.bf16.msra.mxu0 0
      %1380 = vmatpush.bf16.msra.mxu0 0
      %1381 = vmatpush.bf16.msra.mxu0 0
      %1382 = vmatpush.bf16.msra.mxu0 %v1370
      %1383 = vmatpush.bf16.msra.mxu0 %v1369
      %1384 = vmatmul.bf16.gmra.mxu0 %v1374
      %v1385 = vpop.f32.mrf.mxu0
      %v1386 = vadd.f32 0.0, %v1385
      %v1387 = vpop.f32.mrf.mxu0
      %v1388 = vadd.f32 0.0, %v1387
      %1389 = vdwg.mxu0
      %v1390 = vadd.f32 %v962, %v1386
      %v1391 = vadd.f32 %v963, %v1388
      %v1392 = vperm.slane %v965, 3
      %v1393 = vadd.f32 %v1390, %v1392
      %v1394 = vadd.f32 %v1391, %v1392
      %v1395 = vsel %vm339, %v1393, 0.0
      %1396 = vadd.xlane.f32.xlu0 %v1395
      %v1397 = vpop.xlane.xlu0 %1396
      %v1398 = vsel %vm339, %v1394, 0.0
      %1399 = vadd.xlane.f32.xlu0 %v1398
      %v1400 = vpop.xlane.xlu0 %1399
      %v1401 = vmul.f32 %v1397, %v352
      %v1402 = vmul.f32 %v1400, %v352
      %v1403 = vsub.f32 %v1393, %v1401
      %v1404 = vsub.f32 %v1394, %v1402
      %v1405 = vmul.f32 %v1403, %v1403
      %v1406 = vmul.f32 %v1404, %v1404
      %v1407 = vsel %vm339, %v1405, 0.0
      %1408 = vadd.xlane.f32.xlu0 %v1407
      %v1409 = vpop.xlane.xlu0 %1408
      %v1410 = vsel %vm339, %v1406, 0.0
      %1411 = vadd.xlane.f32.xlu0 %v1410
      %v1412 = vpop.xlane.xlu0 %1411
      %v1413 = vmul.f32 %v1409, %v352
      %v1414 = vmul.f32 %v1412, %v352
      %v1415 = vadd.f32 %v1413, 1e-05
      %v1416 = vadd.f32 %v1414, 1e-05
      %v1417 = vrsqrt.pop %v1415
      %v1418 = vmul.f32 %v1417, %v1415
      %v1419 = vmul.f32 %v1418, %v1417
      %v1420 = vmul.f32 0.5, %v1419
      %v1421 = vsub.f32 1.5, %v1420
      %v1422 = vmul.f32 %v1417, %v1421
      %vm1423 = vweird.f32 %v1415
      %vm1424 = vweird.f32 %v1417
      %vm1425 = vmor %vm1423, %vm1424
      %v1426 = vsel %vm1425, %v1417, %v1422
      %v1427 = vrsqrt.pop %v1416
      %v1428 = vmul.f32 %v1427, %v1416
      %v1429 = vmul.f32 %v1428, %v1427
      %v1430 = vmul.f32 0.5, %v1429
      %v1431 = vsub.f32 1.5, %v1430
      %v1432 = vmul.f32 %v1427, %v1431
      %vm1433 = vweird.f32 %v1416
      %vm1434 = vweird.f32 %v1427
      %vm1435 = vmor %vm1433, %vm1434
      %v1436 = vsel %vm1435, %v1427, %v1432
      %v1437 = vmul.f32 %v1403, %v1426
      %v1438 = vmul.f32 %v1404, %v1436
      %v1439 = vperm.slane %v965, 4
      %v1440 = vmul.f32 %v1437, %v1439
      %v1441 = vmul.f32 %v1438, %v1439
      %v1442 = vperm.slane %v965, 5
      %v1443 = vadd.f32 %v1440, %v1442
      %v1444 = vadd.f32 %v1441, %v1442
      %v1445 = vpack.c.bf16 %v1444, %v1443
      %s1446 = scalar_lea.vmem %s4, 16
      %v1447 = vld [vmem:[%s1446] sm:$0xf]
      %v1448 = vld [vmem:[%s1446 + $0x4] sm:$0xf]
      %v1449 = vld [vmem:[%s1446 + $0x8] sm:$0xf]
      %v1450 = vld [vmem:[%s1446 + $0xc] sm:$0xf]
      %v1451 = vperm.slane %v965, 6
      %v1456 = vunpack.c.l.b16 %v1447
      %v1457 = vunpack.c.l.b16 %v1448
      %v1458 = vunpack.c.l.b16 %v1449
      %v1459 = vunpack.c.l.b16 %v1450
      %v1460 = vpack.c.b16 %v1457, %v1456
      %v1461 = vpack.c.b16 %v1459, %v1458
      %v1465 = vsel %vm339, %v1445, 0
      %1467 = vmatpush.bf16.msra.mxu0 0
      %1468 = vmatpush.bf16.msra.mxu0 0
      %1469 = vmatpush.bf16.msra.mxu0 0
      %1470 = vmatpush.bf16.msra.mxu0 0
      %1471 = vmatpush.bf16.msra.mxu0 0
      %1472 = vmatpush.bf16.msra.mxu0 0
      %1473 = vmatpush.bf16.msra.mxu0 %v1461
      %1474 = vmatpush.bf16.msra.mxu0 %v1460
      %1475 = vmatmul.bf16.gmra.mxu0 %v1465
      %v1476 = vpop.f32.mrf.mxu0
      %v1477 = vadd.f32 %v1451, %v1476
      %v1478 = vpop.f32.mrf.mxu0
      %v1479 = vadd.f32 %v1451, %v1478
      %1480 = vdwg.mxu0
      %v1481 = vmul.f32 %v1477, 0.5
      %v1482 = vmul.f32 %v1479, 0.5
      %v1483 = vmul.f32 %v1477, 0.044715
      %v1484 = vmul.f32 %v1479, 0.044715
      %v1485 = vmul.f32 %v1483, %v1477
      %v1486 = vmul.f32 %v1484, %v1479
      %v1487 = vmul.f32 %v1485, %v1477
      %v1488 = vmul.f32 %v1486, %v1479
      %v1489 = vadd.f32 %v1477, %v1487
      %v1490 = vadd.f32 %v1479, %v1488
      %v1491 = vmul.f32 %v1489, 0.7978845
      %v1492 = vmul.f32 %v1490, 0.7978845
      %v1493 = vtanh.pop %v1491
      %v1494 = vtanh.pop %v1492
      %v1495 = vadd.f32 %v1493, 1.0
      %v1496 = vadd.f32 %v1494, 1.0
      %v1497 = vmul.f32 %v1481, %v1495
      %v1498 = vmul.f32 %v1482, %v1496
      %v1499 = vpack.c.bf16 %v1498, %v1497
      %s1500 = scalar_lea.vmem %s5, 64
      %v1501 = vld [vmem:[%s1500] sm:$0xf]
      %v1502 = vld [vmem:[%s1500 + $0x4] sm:$0xf]
      %v1503 = vld [vmem:[%s1500 + $0x8] sm:$0xf]
      %v1504 = vld [vmem:[%s1500 + $0xc] sm:$0xf]
      %v1505 = vld [vmem:[%s1500 + $0x10] sm:$0xf]
      %v1506 = vld [vmem:[%s1500 + $0x14] sm:$0xf]
      %v1507 = vld [vmem:[%s1500 + $0x18] sm:$0xf]
      %v1508 = vld [vmem:[%s1500 + $0x1c] sm:$0xf]
      %v1509 = vld [vmem:[%s1500 + $0x20] sm:$0xf]
      %v1510 = vld [vmem:[%s1500 + $0x24] sm:$0xf]
      %v1511 = vld [vmem:[%s1500 + $0x28] sm:$0xf]
      %v1512 = vld [vmem:[%s1500 + $0x2c] sm:$0xf]
      %v1513 = vld [vmem:[%s1500 + $0x30] sm:$0xf]
      %v1514 = vld [vmem:[%s1500 + $0x34] sm:$0xf]
      %v1515 = vld [vmem:[%s1500 + $0x38] sm:$0xf]
      %v1516 = vld [vmem:[%s1500 + $0x3c] sm:$0xf]
      %v1533 = vunpack.c.l.b16 %v1501
      %v1534 = vunpack.c.l.b16 %v1502
      %v1535 = vunpack.c.l.b16 %v1503
      %v1536 = vunpack.c.l.b16 %v1504
      %v1537 = vunpack.c.l.b16 %v1505
      %v1538 = vunpack.c.l.b16 %v1506
      %v1539 = vunpack.c.l.b16 %v1507
      %v1540 = vunpack.c.l.b16 %v1508
      %v1541 = vunpack.c.l.b16 %v1509
      %v1542 = vunpack.c.l.b16 %v1510
      %v1543 = vunpack.c.l.b16 %v1511
      %v1544 = vunpack.c.l.b16 %v1512
      %v1545 = vunpack.c.l.b16 %v1513
      %v1546 = vunpack.c.l.b16 %v1514
      %v1547 = vunpack.c.l.b16 %v1515
      %v1548 = vunpack.c.l.b16 %v1516
      %v1549 = vpack.c.b16 %v1534, %v1533
      %v1550 = vpack.c.b16 %v1536, %v1535
      %v1551 = vpack.c.b16 %v1538, %v1537
      %v1552 = vpack.c.b16 %v1540, %v1539
      %v1553 = vpack.c.b16 %v1542, %v1541
      %v1554 = vpack.c.b16 %v1544, %v1543
      %v1555 = vpack.c.b16 %v1546, %v1545
      %v1556 = vpack.c.b16 %v1548, %v1547
      %1565 = vmatpush.bf16.msra.mxu0 %v1556
      %1566 = vmatpush.bf16.msra.mxu0 %v1555
      %1567 = vmatpush.bf16.msra.mxu0 %v1554
      %1568 = vmatpush.bf16.msra.mxu0 %v1553
      %1569 = vmatpush.bf16.msra.mxu0 %v1552
      %1570 = vmatpush.bf16.msra.mxu0 %v1551
      %1571 = vmatpush.bf16.msra.mxu0 %v1550
      %1572 = vmatpush.bf16.msra.mxu0 %v1549
      %1573 = vmatmul.bf16.gmra.mxu0 %v1499
      %v1574 = vpop.f32.mrf.mxu0
      %v1575 = vadd.f32 0.0, %v1574
      %v1576 = vpop.f32.mrf.mxu0
      %v1577 = vadd.f32 0.0, %v1576
      %1578 = vdwg.mxu0
      %v1579 = vadd.f32 %v1393, %v1575
      %v1580 = vadd.f32 %v1394, %v1577
      %v1581 = vperm.slane %v965, 7
      %v1582 = vadd.f32 %v1579, %v1581
      %v1583 = vadd.f32 %v1580, %v1581
      %v1584 = vld [vmem:[%s7] sm:$0x3]
      %v1585 = vsel %vm339, %v1582, 0.0
      %1586 = vadd.xlane.f32.xlu0 %v1585
      %v1587 = vpop.xlane.xlu0 %1586
      %v1588 = vsel %vm339, %v1583, 0.0
      %1589 = vadd.xlane.f32.xlu0 %v1588
      %v1590 = vpop.xlane.xlu0 %1589
      %v1591 = vmul.f32 %v1587, %v352
      %v1592 = vmul.f32 %v1590, %v352
      %v1593 = vsub.f32 %v1582, %v1591
      %v1594 = vsub.f32 %v1583, %v1592
      %v1595 = vmul.f32 %v1593, %v1593
      %v1596 = vmul.f32 %v1594, %v1594
      %v1597 = vsel %vm339, %v1595, 0.0
      %1598 = vadd.xlane.f32.xlu0 %v1597
      %v1599 = vpop.xlane.xlu0 %1598
      %v1600 = vsel %vm339, %v1596, 0.0
      %1601 = vadd.xlane.f32.xlu0 %v1600
      %v1602 = vpop.xlane.xlu0 %1601
      %v1603 = vmul.f32 %v1599, %v352
      %v1604 = vmul.f32 %v1602, %v352
      %v1605 = vadd.f32 %v1603, 1e-05
      %v1606 = vadd.f32 %v1604, 1e-05
      %v1607 = vrsqrt.pop %v1605
      %v1608 = vmul.f32 %v1607, %v1605
      %v1609 = vmul.f32 %v1608, %v1607
      %v1610 = vmul.f32 0.5, %v1609
      %v1611 = vsub.f32 1.5, %v1610
      %v1612 = vmul.f32 %v1607, %v1611
      %vm1613 = vweird.f32 %v1605
      %vm1614 = vweird.f32 %v1607
      %vm1615 = vmor %vm1613, %vm1614
      %v1616 = vsel %vm1615, %v1607, %v1612
      %v1617 = vrsqrt.pop %v1606
      %v1618 = vmul.f32 %v1617, %v1606
      %v1619 = vmul.f32 %v1618, %v1617
      %v1620 = vmul.f32 0.5, %v1619
      %v1621 = vsub.f32 1.5, %v1620
      %v1622 = vmul.f32 %v1617, %v1621
      %vm1623 = vweird.f32 %v1606
      %vm1624 = vweird.f32 %v1617
      %vm1625 = vmor %vm1623, %vm1624
      %v1626 = vsel %vm1625, %v1617, %v1622
      %v1627 = vmul.f32 %v1593, %v1616
      %v1628 = vmul.f32 %v1594, %v1626
      %v1629 = vperm.slane %v1584, 0
      %v1630 = vmul.f32 %v1627, %v1629
      %v1631 = vmul.f32 %v1628, %v1629
      %v1632 = vperm.slane %v1584, 1
      %v1633 = vadd.f32 %v1630, %v1632
      %v1634 = vadd.f32 %v1631, %v1632
      %v1635 = vpack.c.bf16 %v1634, %v1633
      %v1636 = vld [vmem:[%s8] sm:$0xf]
      %v1637 = vld [vmem:[%s8 + $0x4] sm:$0xf]
      %v1638 = vld [vmem:[%s8 + $0x8] sm:$0xf]
      %v1639 = vld [vmem:[%s8 + $0xc] sm:$0xf]
      %v1644 = vunpack.c.l.b16 %v1636
      %v1645 = vunpack.c.l.b16 %v1637
      %v1646 = vunpack.c.l.b16 %v1638
      %v1647 = vunpack.c.l.b16 %v1639
      %v1648 = vpack.c.b16 %v1645, %v1644
      %v1649 = vpack.c.b16 %v1647, %v1646
      %v1653 = vsel %vm339, %v1635, 0
      %1655 = vmatpush.bf16.msra.mxu0 0
      %1656 = vmatpush.bf16.msra.mxu0 0
      %1657 = vmatpush.bf16.msra.mxu0 0
      %1658 = vmatpush.bf16.msra.mxu0 0
      %1659 = vmatpush.bf16.msra.mxu0 0
      %1660 = vmatpush.bf16.msra.mxu0 0
      %1661 = vmatpush.bf16.msra.mxu0 %v1649
      %1662 = vmatpush.bf16.msra.mxu0 %v1648
      %1663 = vmatmul.bf16.gmra.mxu0 %v1653
      %v1664 = vpop.f32.mrf.mxu0
      %v1665 = vadd.f32 0.0, %v1664
      %v1666 = vpop.f32.mrf.mxu0
      %v1667 = vadd.f32 0.0, %v1666
      %1668 = vdwg.mxu0
      %1669 = vst [vmem:[%s332] sm:$0xff] %v1665
      %1670 = vst [vmem:[%s332 + $0x8] sm:$0xff] %v1667
      %p1671 = scmp.lt.s32.totalorder %s20, 1
      %s1672 = scalar_select %p1671, %s20, 1
      %s1673 = smul.addr %s1672, 2
      %s1674 = smul.addr %s1673, 8
      %s1675 = scalar_lea.vmem %s9, %s1674
      // Predicated region
      $region57: #{clip_caption_forward.1} parent=55 // pred_check
        %p1676 = pneg %p232
      $region58: #{clip_caption_forward.1} parent=55 // pred_check_branch
        %1678 = sbr.rel (%p1676) target = $region60
      $region59: #{clip_caption_forward.1} parent=55 // pred_region
        _
      $region60: #{clip_caption_forward.1} parent=55 // pred_fallthru
        _
    $region56: #{clip_caption_forward.1} parent=5 // pred_fallthru
      _
    %p1679 = scmp.le.s32.totalorder 2, %s15
    // Predicated region
    $region61: #{clip_caption_forward.1} parent=5 // pred_check
      %p1680 = pneg %p1679
    $region62: #{clip_caption_forward.1} parent=5 // pred_check_branch
      %1682 = sbr.rel (%p1680) target = $region64
    $region63: #{clip_caption_forward.1} parent=5 // pred_region
      %s1683 = ssub.s32 %s15, 2
      // Predicated region
      $region65: #{clip_caption_forward.1} parent=63 // pred_check
        %p1684 = pneg %p238
      $region66: #{clip_caption_forward.1} parent=63 // pred_check_branch
        %1686 = sbr.rel (%p1684) target = $region68
      $region67: #{clip_caption_forward.1} parent=63 // pred_region
        %p1687 = scmp.lt.s32.totalorder %s21, 1
        %s1688 = scalar_select %p1687, %s21, 1
        %s1689 = smul.addr %s1688, 2
        %s1690 = smul.addr %s1689, 8
        %s1691 = scalar_lea.vmem %s9, %s1690
      $region68: #{clip_caption_forward.1} parent=63 // pred_fallthru
        _
    $region64: #{clip_caption_forward.1} parent=5 // pred_fallthru
      _
  $region6: #{clip_caption_forward.1} parent=0 // loop_footer
    %s19 = sadd.s32 1, %s15
  $region7: #{clip_caption_forward.1} parent=0 // loop_footer_branch
    %14 = sbr.rel target = $region3
  $region8: #{clip_caption_forward.1} parent=0 // loop_exit
    _

</llo_original>
